<compile_context>
chip_gen: v5e
topology: v5e:2x2
jax: 0.10.0
libtpu: 0.0.40
codegen_flags: <defaults>
</compile_context>

<pallas_src>
import functools

import numpy as np

import jax
import jax.numpy as jnp
from jax import lax
from jax.experimental import pallas as pl
from jax.experimental.pallas import tpu as pltpu


def _vmem_specs(n):
    return [pl.BlockSpec(memory_space=pltpu.MemorySpace.VMEM) for _ in range(n)]


def _round8(x):
    return ((x + 7) // 8) * 8


def _const_layout(T, N, C, H, a_sum):
    """Row offsets of the static helper matrices inside the const slab."""
    r_mask = 0
    r_exph = r_mask + _round8(T * N)
    r_sumt = r_exph + _round8(H)
    r_iavg = r_sumt + _round8(T)
    r_expc = r_iavg + _round8(a_sum)
    r_redm = r_expc + _round8(C)
    rows = r_redm + _round8(C * H)
    width = max(N * H, C * H, T * N, a_sum, H, 128)
    return dict(mask=r_mask, exph=r_exph, sumt=r_sumt, iavg=r_iavg,
                expc=r_expc, redm=r_redm, rows=rows, width=width)


def _build_const_slab(T, N, C, H, a_sum, n_branches, per_branch):
    lay = _const_layout(T, N, C, H, a_sum)
    const = np.zeros((lay["rows"], lay["width"]), np.float32)
    # flat_mask[t*N + n, n*H:(n+1)*H] = 1  (node -> lane-block placement)
    mask = np.zeros((T * N, N * H), np.float32)
    for n in range(N):
        mask[n::N, n * H:(n + 1) * H] = 1.0
    const[lay["mask"]:lay["mask"] + T * N, :N * H] = mask
    # expand_h[h, n*H + h] = 1 for all n  (replicate H lanes into every node block)
    const[lay["exph"]:lay["exph"] + H, :N * H] = np.tile(
        np.eye(H, dtype=np.float32), (1, N))
    # sum_t[t, t*N:(t+1)*N] = 1  (sum the N rows of each time step)
    const[lay["sumt"]:lay["sumt"] + T, :T * N] = np.kron(
        np.eye(T, dtype=np.float32), np.ones((1, N), np.float32))
    # I - per-branch averaging matrix (folds the dueling mean subtraction)
    const[lay["iavg"]:lay["iavg"] + a_sum, :a_sum] = (
        np.eye(a_sum, dtype=np.float32)
        - np.kron(np.eye(n_branches, dtype=np.float32),
                  np.full((per_branch, per_branch), 1.0 / per_branch, np.float32)))
    # expand_c[c, c*H:(c+1)*H] = 1  (replicate each input channel over H lanes)
    const[lay["expc"]:lay["expc"] + C, :C * H] = np.kron(
        np.eye(C, dtype=np.float32), np.ones((1, H), np.float32))
    # reduce_m = vertically tiled identity  (sum the C groups of H lanes)
    const[lay["redm"]:lay["redm"] + C * H, :H] = np.tile(
        np.eye(H, dtype=np.float32), (C, 1))
    return const


# --------------------------------------------------------------------------
# Fused kernel: NNConv+ReLU -> multi-layer GRU (gate order r,z,n) -> dueling head
# --------------------------------------------------------------------------
def fused_kernel(x_ref, eidx_ref, ea_ref, h0_ref, conv_ref, gru_ref, head_ref,
                 const_ref, o_ref, *, seq_len, nodes, in_ch, hidden,
                 num_layers, num_edges, n_branches, per_branch):
    T, N, C, H, L, E = seq_len, nodes, in_ch, hidden, num_layers, num_edges
    n_total = T * N
    a_sum = n_branches * per_branch
    f32 = jnp.float32
    lay = _const_layout(T, N, C, H, a_sum)

    # ---- static helper matrices (DMA'd constants; nothing built in-kernel)
    expand_c = const_ref[lay["expc"]:lay["expc"] + C, 0:C * H]          # (C, C*H)
    reduce_m = const_ref[lay["redm"]:lay["redm"] + C * H, 0:H]          # (C*H, H)
    expand_h = const_ref[lay["exph"]:lay["exph"] + H, 0:N * H]          # (H, N*H)
    flat_mask = const_ref[lay["mask"]:lay["mask"] + n_total, 0:N * H]   # (T*N, N*H)
    sum_t = const_ref[lay["sumt"]:lay["sumt"] + T, 0:n_total]           # (T, T*N)
    i_minus_avg = const_ref[lay["iavg"]:lay["iavg"] + a_sum, 0:a_sum]   # (a_sum, a_sum)

    # ---------------- NNConv (edge-conditioned conv) + ReLU ----------------
    x = x_ref[...]                                       # (T*N, C)
    ea = ea_ref[...]                                     # (E, 1)
    src = eidx_ref[:, 0:1]                               # (E, 1) int32
    tgt = eidx_ref[:, 1:2]                               # (E, 1) int32

    # one-hot gather/scatter matrices from int32 indices (data dependent).
    # NOTE: matches the PyTorch module literally — the edge list indexes the
    # flattened (T*N) node set exactly as passed in.
    node_ids = lax.broadcasted_iota(jnp.int32, (E, n_total), 1)
    src_oh = (src == node_ids).astype(f32)               # (E, T*N)
    tgt_oh = (tgt == node_ids).astype(f32)               # (E, T*N)

    r_w2 = _round8(4 + C)
    nn1_w1 = conv_ref[0:1, 0:64]
    nn1_b1 = conv_ref[1:2, 0:64]
    nn1_b2 = conv_ref[2:3, 0:C * H]
    conv_b = conv_ref[3:4, 0:H]
    root = conv_ref[4:4 + C, 0:H]
    nn1_w2 = conv_ref[r_w2:r_w2 + 64, 0:C * H]

    # edge MLP: Linear(1,64) -> ReLU -> Linear(64, C*H)
    h1 = jnp.maximum(ea * nn1_w1 + nn1_b1, 0.0)                              # (E, 64)
    we = jnp.dot(h1, nn1_w2, preferred_element_type=f32) + nn1_b2            # (E, C*H)

    xg = jnp.dot(src_oh, x, preferred_element_type=f32)                      # (E, C)
    xg_wide = jnp.dot(xg, expand_c, preferred_element_type=f32)              # (E, C*H)
    msg_wide = xg_wide * we                                                  # (E, C*H)
    agg_wide = lax.dot_general(tgt_oh, msg_wide,
                               dimension_numbers=(((0,), (0,)), ((), ())),
                               preferred_element_type=f32)                   # (T*N, C*H)
    agg = jnp.dot(agg_wide, reduce_m, preferred_element_type=f32)            # (T*N, H)
    conv = jnp.maximum(
        agg + jnp.dot(x, root, preferred_element_type=f32) + conv_b, 0.0)    # (T*N, H)

    # ---------------- multi-layer GRU (time-major, gate order r,z,n) -------
    y_stack = conv                                       # (T*N, H), layer-0 input as-is
    for l in range(L):
        gw = gru_ref[l]                                  # (2H+8, 3H)
        wih = gw[0:H, :]                                 # (H, 3H)
        whh = gw[H:2 * H, :]                             # (H, 3H)
        b_fold = gw[2 * H:2 * H + 1, :]                  # bih + [bhh_r | bhh_z | 0]
        bhh_n = gw[2 * H + 1:2 * H + 2, 2 * H:]          # (1, H)

        # hoisted input projection with pre-folded r/z biases
        gi_all = jnp.dot(y_stack, wih, preferred_element_type=f32) + b_fold  # (T*N, 3H)

        h = h0_ref[l]                                    # (N, H)
        steps = []
        for t in range(T):
            gi = gi_all[t * N:(t + 1) * N, :]            # 8-row aligned slice
            gh = jnp.dot(h, whh, preferred_element_type=f32)
            rz = jax.nn.sigmoid(gi[:, :2 * H] + gh[:, :2 * H])   # one sigmoid for r|z
            r = rz[:, :H]
            z = rz[:, H:]
            n_g = jnp.tanh(gi[:, 2 * H:] + r * (gh[:, 2 * H:] + bhh_n))
            h = n_g + z * (h - n_g)                      # == (1-z)*n + z*h
            steps.append(h)
        y_stack = jnp.concatenate(steps, axis=0) if T > 1 else steps[0]

    # ---------------- dueling head (one K = N*H matmul) ---------------------
    NH = N * H
    head_w1 = head_ref[0:NH, :]                          # (N*H, a_sum+64) = [adv_w | v1_w]
    v2_w = head_ref[NH:NH + 64, 0:64]
    v3_w = head_ref[NH:NH + 64, 64:65]
    head_b1 = head_ref[NH + 64:NH + 65, :]               # [adv_b | v1_b]
    v2_b = head_ref[NH + 65:NH + 66, 0:64]
    v3_b = head_ref[NH + 66:NH + 67, 0:1]

    # feat[t, n*H + h] = y_stack[t*N + n, h], built with matmuls (no relayout)
    y_rep = jnp.dot(y_stack, expand_h, preferred_element_type=f32)           # (T*N, N*H)
    feat = jnp.dot(sum_t, y_rep * flat_mask, preferred_element_type=f32)     # (T, N*H)

    av = jnp.maximum(
        jnp.dot(feat, head_w1, preferred_element_type=f32) + head_b1, 0.0)   # (T, a_sum+64)
    adv = av[:, :a_sum]
    val = av[:, a_sum:]
    val = jnp.maximum(jnp.dot(val, v2_w, preferred_element_type=f32) + v2_b, 0.0)
    val = jnp.dot(val, v3_w, preferred_element_type=f32) + v3_b              # (T, 1)

    # out = val + adv - per_branch_mean(adv) = val + adv @ (I - avg)
    o_ref[...] = val + jnp.dot(adv, i_minus_avg, preferred_element_type=f32)


# --------------------------------------------------------------------------
# Wrapper: full forward pass in a single pallas_call (8 packed inputs)
# --------------------------------------------------------------------------
def bhs_test_forward(x, edge_index, edge_attr, hidden0, params, num_actions):
    T, N, C = x.shape
    H = params["root"].shape[1]
    L = hidden0.shape[0]
    E = edge_attr.shape[0]
    n_branches = len(num_actions)
    if any(a != num_actions[0] for a in num_actions):
        # TODO(synk): unequal branch sizes need a per-branch averaging matrix.
        raise ValueError("bhs_test_forward assumes equal-sized action branches")
    per_branch = sum(num_actions) // n_branches
    a_sum = n_branches * per_branch
    f32 = jnp.float32

    x_flat = x.reshape(T * N, C).astype(f32)
    eidx = jnp.stack([edge_index[0], edge_index[1]], axis=1).astype(jnp.int32)  # (E, 2)
    edge_attr = edge_attr.astype(f32)
    hidden0 = hidden0.astype(f32)

    # ---- conv weights slab -------------------------------------------------
    CH = C * H
    cw = max(CH, 64)
    r_w2 = _round8(4 + C)
    conv_slab = jnp.zeros((r_w2 + 64, cw), f32)
    conv_slab = conv_slab.at[0, :64].set(params["nn1_w1"][0])
    conv_slab = conv_slab.at[1, :64].set(params["nn1_b1"][0])
    conv_slab = conv_slab.at[2, :CH].set(params["nn1_b2"][0])
    conv_slab = conv_slab.at[3, :H].set(params["conv_b"][0])
    conv_slab = conv_slab.at[4:4 + C, :H].set(params["root"])
    conv_slab = conv_slab.at[r_w2:r_w2 + 64, :CH].set(params["nn1_w2"])

    # ---- GRU weights slab (wih | whh | folded biases) ----------------------
    gru_slab = jnp.zeros((L, 2 * H + 8, 3 * H), f32)
    gru_slab = gru_slab.at[:, :H, :].set(params["gru_wih"])
    gru_slab = gru_slab.at[:, H:2 * H, :].set(params["gru_whh"])
    bih = params["gru_bih"][:, 0, :]
    bhh = params["gru_bhh"][:, 0, :]
    b_fold = bih + jnp.concatenate([bhh[:, :2 * H], jnp.zeros((L, H), f32)], axis=-1)
    gru_slab = gru_slab.at[:, 2 * H, :].set(b_fold)
    gru_slab = gru_slab.at[:, 2 * H + 1, :].set(bhh)

    # ---- dueling-head weights slab ([adv_w|v1_w], v2_w, v3_w, biases) ------
    NH = N * H
    hw = a_sum + 64
    head_slab = jnp.zeros((NH + 64 + 8, hw), f32)
    head_slab = head_slab.at[:NH, :a_sum].set(params["adv_w"])
    head_slab = head_slab.at[:NH, a_sum:].set(params["v1_w"])
    head_slab = head_slab.at[NH:NH + 64, :64].set(params["v2_w"])
    head_slab = head_slab.at[NH:NH + 64, 64:65].set(params["v3_w"])
    head_slab = head_slab.at[NH + 64, :a_sum].set(params["adv_b"][0])
    head_slab = head_slab.at[NH + 64, a_sum:].set(params["v1_b"][0])
    head_slab = head_slab.at[NH + 65, :64].set(params["v2_b"][0])
    head_slab = head_slab.at[NH + 66, :1].set(params["v3_b"][0])

    # ---- static helper matrices (trace-time numpy constants) ---------------
    const_slab = jnp.asarray(
        _build_const_slab(T, N, C, H, a_sum, n_branches, per_branch))

    kern = functools.partial(
        fused_kernel, seq_len=T, nodes=N, in_ch=C, hidden=H, num_layers=L,
        num_edges=E, n_branches=n_branches, per_branch=per_branch)

    # TODO(synk): at realistic graph/sequence sizes, add a leading grid axis
    # (batch or time-chunks) with dimension_semantics=("parallel", ...) for
    # v7x's 2 TensorCores, size tiles against v7x's 64 MiB VMEM, and switch
    # the one-hot gather/scatter to scalar-prefetched index DMA.
    out = pl.pallas_call(
        kern,
        out_shape=jax.ShapeDtypeStruct((T, a_sum), jnp.float32),
        in_specs=_vmem_specs(8),
        out_specs=pl.BlockSpec(memory_space=pltpu.MemorySpace.VMEM),
    )(x_flat, eidx, edge_attr, hidden0, conv_slab, gru_slab, head_slab, const_slab)
    return out.reshape(T, n_branches, per_branch)


# --------------------------------------------------------------------------
# Pure-JAX reference (for correctness check)
# --------------------------------------------------------------------------
def reference_forward(x, edge_index, edge_attr, hidden0, p, num_actions):
    T, N, C = x.shape
    H = p["root"].shape[1]
    xf = x.reshape(T * N, C)
    src_oh = jax.nn.one_hot(edge_index[0], T * N, dtype=jnp.float32)
    tgt_oh = jax.nn.one_hot(edge_index[1], T * N, dtype=jnp.float32)

    h1 = jax.nn.relu(edge_attr @ p["nn1_w1"] + p["nn1_b1"])
    we = h1 @ p["nn1_w2"] + p["nn1_b2"]
    xg = src_oh @ xf
    W = we.reshape(-1, C, H)
    msg = jnp.einsum("ec,ech->eh", xg, W)
    agg = tgt_oh.T @ msg
    conv = jax.nn.relu(agg + xf @ p["root"] + p["conv_b"])

    seq = conv.reshape(T, N, H)
    L = hidden0.shape[0]
    y = seq
    for l in range(L):
        h = hidden0[l]
        outs = []
        for t in range(T):
            gi = y[t] @ p["gru_wih"][l] + p["gru_bih"][l]
            gh = h @ p["gru_whh"][l] + p["gru_bhh"][l]
            r = jax.nn.sigmoid(gi[:, :H] + gh[:, :H])
            z = jax.nn.sigmoid(gi[:, H:2 * H] + gh[:, H:2 * H])
            n = jnp.tanh(gi[:, 2 * H:] + r * gh[:, 2 * H:])
            h = (1.0 - z) * n + z * h
            outs.append(h)
        y = jnp.stack(outs, axis=0)

    feat = y.reshape(T, N * H)
    adv = jax.nn.relu(feat @ p["adv_w"] + p["adv_b"])
    val = jax.nn.relu(feat @ p["v1_w"] + p["v1_b"])
    val = jax.nn.relu(val @ p["v2_w"] + p["v2_b"])
    val = val @ p["v3_w"] + p["v3_b"]
    adv = adv.reshape(T, len(num_actions), -1)
    return val[:, :, None] + adv - adv.mean(-1, keepdims=True)


# --------------------------------------------------------------------------
if __name__ == "__main__":
    # Small shapes consistent with the module:
    #   input_shape = (N, C) = (8, 4); hidden.shape = (L, N, H) = (2, 8, 32)
    #   num_actions = (4, 4); edge list (2, E) with E = 16; edge_attr (E, 1)
    #   forward input x: (seq, nodes, node_feat) = (2, 8, 4)
    T, N, C, H, L, E = 2, 8, 4, 32, 2, 16
    num_actions = (4, 4)
    feature_size = N * H
    a_sum = sum(num_actions)

    key = jax.random.PRNGKey(0)
    ks = jax.random.split(key, 24)

    def w(k, shape, scale=0.1):
        return (scale * jax.random.normal(k, shape)).astype(jnp.float32)

    params = {
        # nn1: Linear(1, 64) -> ReLU -> Linear(64, C*H)
        "nn1_w1": w(ks[0], (1, 64)),
        "nn1_b1": w(ks[1], (1, 64)),
        "nn1_w2": w(ks[2], (64, C * H)),
        "nn1_b2": w(ks[3], (1, C * H)),
        # NNConv root weight + bias
        "root":   w(ks[4], (C, H)),
        "conv_b": w(ks[5], (1, H)),
        # GRU: per-layer weights, stored pre-transposed as (H, 3H); gate order r,z,n
        "gru_wih": w(ks[6], (L, H, 3 * H)),
        "gru_whh": w(ks[7], (L, H, 3 * H)),
        "gru_bih": w(ks[8], (L, 1, 3 * H)),
        "gru_bhh": w(ks[9], (L, 1, 3 * H)),
        # heads
        "adv_w": w(ks[10], (feature_size, a_sum)),
        "adv_b": w(ks[11], (1, a_sum)),
        "v1_w":  w(ks[12], (feature_size, 64)),
        "v1_b":  w(ks[13], (1, 64)),
        "v2_w":  w(ks[14], (64, 64)),
        "v2_b":  w(ks[15], (1, 64)),
        "v3_w":  w(ks[16], (64, 1)),
        "v3_b":  w(ks[17], (1, 1)),
    }

    x = jax.random.normal(ks[18], (T, N, C), dtype=jnp.float32)
    edge_index = jnp.stack([
        jax.random.randint(ks[19], (E,), 0, N),
        jax.random.randint(ks[20], (E,), 0, N),
    ], axis=0)                                                    # (2, E)
    edge_attr = jax.random.normal(ks[21], (E, 1), dtype=jnp.float32)
    hidden0 = jax.random.normal(ks[22], (L, N, H), dtype=jnp.float32)

    out = bhs_test_forward(x, edge_index, edge_attr, hidden0, params, num_actions)
    out = jax.block_until_ready(out)

    ref = reference_forward(x, edge_index, edge_attr, hidden0, params, num_actions)
    ref = jax.block_until_ready(ref)

    assert out.shape == (T, len(num_actions), a_sum // len(num_actions))
    max_diff = float(jnp.max(jnp.abs(out - ref)))
    assert max_diff < 1e-2, f"mismatch vs reference: {max_diff}"

    print("KERNEL_OK")
</pallas_src>

<mosaic_0001>
module attributes {stable_mosaic.version = 11 : i64} {
  func.func @fused_kernel(%arg0: memref<16x4xf32, #tpu.memory_space<vmem>>, %arg1: memref<16x2xi32, #tpu.memory_space<vmem>>, %arg2: memref<16x1xf32, #tpu.memory_space<vmem>>, %arg3: memref<2x8x32xf32, #tpu.memory_space<vmem>>, %arg4: memref<72x128xf32, #tpu.memory_space<vmem>>, %arg5: memref<2x72x96xf32, #tpu.memory_space<vmem>>, %arg6: memref<328x72xf32, #tpu.memory_space<vmem>>, %arg7: memref<200x256xf32, #tpu.memory_space<vmem>>, %arg8: memref<2x8xf32, #tpu.memory_space<vmem>>) attributes {dimension_semantics = [], scalar_prefetch = 0 : i64, scratch_operands = 0 : i64, tpu.core_type = #tpu.core_type<tc>} {
    %c64 = arith.constant 64 : index
    %c0 = arith.constant 0 : index
    %0 = vector.load %arg7[%c64, %c0] : memref<200x256xf32, #tpu.memory_space<vmem>>, vector<4x128xf32>
    %c72 = arith.constant 72 : index
    %c0_0 = arith.constant 0 : index
    %1 = vector.load %arg7[%c72, %c0_0] : memref<200x256xf32, #tpu.memory_space<vmem>>, vector<128x32xf32>
    %c16 = arith.constant 16 : index
    %c0_1 = arith.constant 0 : index
    %2 = vector.load %arg7[%c16, %c0_1] : memref<200x256xf32, #tpu.memory_space<vmem>>, vector<32x256xf32>
    %c0_2 = arith.constant 0 : index
    %c0_3 = arith.constant 0 : index
    %3 = vector.load %arg7[%c0_2, %c0_3] : memref<200x256xf32, #tpu.memory_space<vmem>>, vector<16x256xf32>
    %c48 = arith.constant 48 : index
    %c0_4 = arith.constant 0 : index
    %4 = vector.load %arg7[%c48, %c0_4] : memref<200x256xf32, #tpu.memory_space<vmem>>, vector<2x16xf32>
    %c56 = arith.constant 56 : index
    %c0_5 = arith.constant 0 : index
    %5 = vector.load %arg7[%c56, %c0_5] : memref<200x256xf32, #tpu.memory_space<vmem>>, vector<8x8xf32>
    %c0_6 = arith.constant 0 : index
    %c0_7 = arith.constant 0 : index
    %6 = vector.load %arg0[%c0_6, %c0_7] : memref<16x4xf32, #tpu.memory_space<vmem>>, vector<16x4xf32>
    %c0_8 = arith.constant 0 : index
    %c0_9 = arith.constant 0 : index
    %7 = vector.load %arg2[%c0_8, %c0_9] : memref<16x1xf32, #tpu.memory_space<vmem>>, vector<16x1xf32>
    %c0_10 = arith.constant 0 : index
    %c0_11 = arith.constant 0 : index
    %8 = vector.load %arg1[%c0_10, %c0_11] : memref<16x2xi32, #tpu.memory_space<vmem>>, vector<16x1xi32>
    %c0_12 = arith.constant 0 : index
    %c1 = arith.constant 1 : index
    %9 = vector.load %arg1[%c0_12, %c1] : memref<16x2xi32, #tpu.memory_space<vmem>>, vector<16x1xi32>
    %10 = tpu.iota {dimensions = array<i32: 1>} : vector<16x16xi32>
    %11 = vector.broadcast %8 : vector<16x1xi32> to vector<16x16xi32>
    %12 = arith.cmpi eq, %11, %10 : vector<16x16xi32>
    %13 = arith.extui %12 : vector<16x16xi1> to vector<16x16xi32>
    %14 = arith.sitofp %13 : vector<16x16xi32> to vector<16x16xf32>
    %15 = vector.broadcast %9 : vector<16x1xi32> to vector<16x16xi32>
    %16 = arith.cmpi eq, %15, %10 : vector<16x16xi32>
    %17 = arith.extui %16 : vector<16x16xi1> to vector<16x16xi32>
    %18 = arith.sitofp %17 : vector<16x16xi32> to vector<16x16xf32>
    %c0_13 = arith.constant 0 : index
    %c0_14 = arith.constant 0 : index
    %19 = vector.load %arg4[%c0_13, %c0_14] : memref<72x128xf32, #tpu.memory_space<vmem>>, vector<1x64xf32>
    %c1_15 = arith.constant 1 : index
    %c0_16 = arith.constant 0 : index
    %20 = vector.load %arg4[%c1_15, %c0_16] : memref<72x128xf32, #tpu.memory_space<vmem>>, vector<1x64xf32>
    %c2 = arith.constant 2 : index
    %c0_17 = arith.constant 0 : index
    %21 = vector.load %arg4[%c2, %c0_17] : memref<72x128xf32, #tpu.memory_space<vmem>>, vector<1x128xf32>
    %c3 = arith.constant 3 : index
    %c0_18 = arith.constant 0 : index
    %22 = vector.load %arg4[%c3, %c0_18] : memref<72x128xf32, #tpu.memory_space<vmem>>, vector<1x32xf32>
    %c4 = arith.constant 4 : index
    %c0_19 = arith.constant 0 : index
    %23 = vector.load %arg4[%c4, %c0_19] : memref<72x128xf32, #tpu.memory_space<vmem>>, vector<4x32xf32>
    %c8 = arith.constant 8 : index
    %c0_20 = arith.constant 0 : index
    %24 = vector.load %arg4[%c8, %c0_20] : memref<72x128xf32, #tpu.memory_space<vmem>>, vector<64x128xf32>
    %25 = vector.broadcast %7 : vector<16x1xf32> to vector<16x64xf32>
    %26 = vector.broadcast %19 : vector<1x64xf32> to vector<16x64xf32>
    %27 = arith.mulf %25, %26 : vector<16x64xf32>
    %28 = vector.broadcast %20 : vector<1x64xf32> to vector<16x64xf32>
    %29 = arith.addf %27, %28 : vector<16x64xf32>
    %cst = arith.constant 0.000000e+00 : f32
    %30 = vector.broadcast %cst : f32 to vector<16x64xf32>
    %31 = arith.maximumf %29, %30 : vector<16x64xf32>
    %cst_21 = arith.constant dense<0.000000e+00> : vector<16x128xf32>
    %32 = tpu.matmul %31, %24, %cst_21 {dimension_numbers = #tpu.dot_dimension_numbers<[1], [0], [0], [1], [0, 0, 1, 1], [], []>} : vector<16x64xf32>, vector<64x128xf32>, vector<16x128xf32> -> vector<16x128xf32>
    %33 = vector.broadcast %21 : vector<1x128xf32> to vector<16x128xf32>
    %34 = arith.addf %32, %33 : vector<16x128xf32>
    %cst_22 = arith.constant dense<0.000000e+00> : vector<16x4xf32>
    %35 = tpu.matmul %14, %6, %cst_22 {dimension_numbers = #tpu.dot_dimension_numbers<[1], [0], [0], [1], [0, 0, 1, 1], [], []>} : vector<16x16xf32>, vector<16x4xf32>, vector<16x4xf32> -> vector<16x4xf32>
    %cst_23 = arith.constant dense<0.000000e+00> : vector<16x128xf32>
    %36 = tpu.matmul %35, %0, %cst_23 {dimension_numbers = #tpu.dot_dimension_numbers<[1], [0], [0], [1], [0, 0, 1, 1], [], []>} : vector<16x4xf32>, vector<4x128xf32>, vector<16x128xf32> -> vector<16x128xf32>
    %37 = arith.mulf %36, %34 : vector<16x128xf32>
    %cst_24 = arith.constant dense<0.000000e+00> : vector<16x128xf32>
    %38 = tpu.matmul %18, %37, %cst_24 {dimension_numbers = #tpu.dot_dimension_numbers<[0], [0], [1], [1], [0, 1, 1, 1], [], []>} : vector<16x16xf32>, vector<16x128xf32>, vector<16x128xf32> -> vector<16x128xf32>
    %cst_25 = arith.constant dense<0.000000e+00> : vector<16x32xf32>
    %39 = tpu.matmul %38, %1, %cst_25 {dimension_numbers = #tpu.dot_dimension_numbers<[1], [0], [0], [1], [0, 0, 1, 1], [], []>} : vector<16x128xf32>, vector<128x32xf32>, vector<16x32xf32> -> vector<16x32xf32>
    %cst_26 = arith.constant dense<0.000000e+00> : vector<16x32xf32>
    %40 = tpu.matmul %6, %23, %cst_26 {dimension_numbers = #tpu.dot_dimension_numbers<[1], [0], [0], [1], [0, 0, 1, 1], [], []>} : vector<16x4xf32>, vector<4x32xf32>, vector<16x32xf32> -> vector<16x32xf32>
    %41 = arith.addf %39, %40 : vector<16x32xf32>
    %42 = vector.broadcast %22 : vector<1x32xf32> to vector<16x32xf32>
    %43 = arith.addf %41, %42 : vector<16x32xf32>
    %cst_27 = arith.constant 0.000000e+00 : f32
    %44 = vector.broadcast %cst_27 : f32 to vector<16x32xf32>
    %45 = arith.maximumf %43, %44 : vector<16x32xf32>
    %c0_28 = arith.constant 0 : index
    %c0_29 = arith.constant 0 : index
    %c0_30 = arith.constant 0 : index
    %46 = vector.load %arg5[%c0_28, %c0_29, %c0_30] : memref<2x72x96xf32, #tpu.memory_space<vmem>>, vector<1x72x96xf32>
    %47 = vector.shape_cast %46 : vector<1x72x96xf32> to vector<72x96xf32>
    %48 = vector.extract_strided_slice %47 {offsets = [0, 0], sizes = [32, 96], strides = [1, 1]} : vector<72x96xf32> to vector<32x96xf32>
    %49 = vector.extract_strided_slice %47 {offsets = [32, 0], sizes = [32, 96], strides = [1, 1]} : vector<72x96xf32> to vector<32x96xf32>
    %50 = vector.extract_strided_slice %47 {offsets = [64, 0], sizes = [1, 96], strides = [1, 1]} : vector<72x96xf32> to vector<1x96xf32>
    %51 = vector.extract_strided_slice %47 {offsets = [65, 64], sizes = [1, 32], strides = [1, 1]} : vector<72x96xf32> to vector<1x32xf32>
    %cst_31 = arith.constant dense<0.000000e+00> : vector<16x96xf32>
    %52 = tpu.matmul %45, %48, %cst_31 {dimension_numbers = #tpu.dot_dimension_numbers<[1], [0], [0], [1], [0, 0, 1, 1], [], []>} : vector<16x32xf32>, vector<32x96xf32>, vector<16x96xf32> -> vector<16x96xf32>
    %53 = vector.broadcast %50 : vector<1x96xf32> to vector<16x96xf32>
    %54 = arith.addf %52, %53 : vector<16x96xf32>
    %c0_32 = arith.constant 0 : index
    %c0_33 = arith.constant 0 : index
    %c0_34 = arith.constant 0 : index
    %55 = vector.load %arg3[%c0_32, %c0_33, %c0_34] : memref<2x8x32xf32, #tpu.memory_space<vmem>>, vector<1x8x32xf32>
    %56 = vector.shape_cast %55 : vector<1x8x32xf32> to vector<8x32xf32>
    %57 = vector.extract_strided_slice %54 {offsets = [0, 0], sizes = [8, 96], strides = [1, 1]} : vector<16x96xf32> to vector<8x96xf32>
    %cst_35 = arith.constant dense<0.000000e+00> : vector<8x96xf32>
    %58 = tpu.matmul %56, %49, %cst_35 {dimension_numbers = #tpu.dot_dimension_numbers<[1], [0], [0], [1], [0, 0, 1, 1], [], []>} : vector<8x32xf32>, vector<32x96xf32>, vector<8x96xf32> -> vector<8x96xf32>
    %59 = vector.extract_strided_slice %57 {offsets = [0, 0], sizes = [8, 64], strides = [1, 1]} : vector<8x96xf32> to vector<8x64xf32>
    %60 = vector.extract_strided_slice %58 {offsets = [0, 0], sizes = [8, 64], strides = [1, 1]} : vector<8x96xf32> to vector<8x64xf32>
    %61 = arith.addf %59, %60 : vector<8x64xf32>
    %62 = arith.negf %61 : vector<8x64xf32>
    %63 = math.exp %62 : vector<8x64xf32>
    %cst_36 = arith.constant 1.000000e+00 : f32
    %64 = vector.broadcast %cst_36 : f32 to vector<8x64xf32>
    %65 = arith.addf %64, %63 : vector<8x64xf32>
    %66 = arith.divf %64, %65 : vector<8x64xf32>
    %67 = vector.extract_strided_slice %66 {offsets = [0, 0], sizes = [8, 32], strides = [1, 1]} : vector<8x64xf32> to vector<8x32xf32>
    %68 = vector.extract_strided_slice %66 {offsets = [0, 32], sizes = [8, 32], strides = [1, 1]} : vector<8x64xf32> to vector<8x32xf32>
    %69 = vector.extract_strided_slice %57 {offsets = [0, 64], sizes = [8, 32], strides = [1, 1]} : vector<8x96xf32> to vector<8x32xf32>
    %70 = vector.extract_strided_slice %58 {offsets = [0, 64], sizes = [8, 32], strides = [1, 1]} : vector<8x96xf32> to vector<8x32xf32>
    %71 = vector.broadcast %51 : vector<1x32xf32> to vector<8x32xf32>
    %72 = arith.addf %70, %71 : vector<8x32xf32>
    %73 = arith.mulf %67, %72 : vector<8x32xf32>
    %74 = arith.addf %69, %73 : vector<8x32xf32>
    %75 = math.tanh %74 : vector<8x32xf32>
    %76 = arith.subf %56, %75 : vector<8x32xf32>
    %77 = arith.mulf %68, %76 : vector<8x32xf32>
    %78 = arith.addf %75, %77 : vector<8x32xf32>
    %79 = vector.extract_strided_slice %54 {offsets = [8, 0], sizes = [8, 96], strides = [1, 1]} : vector<16x96xf32> to vector<8x96xf32>
    %cst_37 = arith.constant dense<0.000000e+00> : vector<8x96xf32>
    %80 = tpu.matmul %78, %49, %cst_37 {dimension_numbers = #tpu.dot_dimension_numbers<[1], [0], [0], [1], [0, 0, 1, 1], [], []>} : vector<8x32xf32>, vector<32x96xf32>, vector<8x96xf32> -> vector<8x96xf32>
    %81 = vector.extract_strided_slice %79 {offsets = [0, 0], sizes = [8, 64], strides = [1, 1]} : vector<8x96xf32> to vector<8x64xf32>
    %82 = vector.extract_strided_slice %80 {offsets = [0, 0], sizes = [8, 64], strides = [1, 1]} : vector<8x96xf32> to vector<8x64xf32>
    %83 = arith.addf %81, %82 : vector<8x64xf32>
    %84 = arith.negf %83 : vector<8x64xf32>
    %85 = math.exp %84 : vector<8x64xf32>
    %cst_38 = arith.constant 1.000000e+00 : f32
    %86 = vector.broadcast %cst_38 : f32 to vector<8x64xf32>
    %87 = arith.addf %86, %85 : vector<8x64xf32>
    %88 = arith.divf %86, %87 : vector<8x64xf32>
    %89 = vector.extract_strided_slice %88 {offsets = [0, 0], sizes = [8, 32], strides = [1, 1]} : vector<8x64xf32> to vector<8x32xf32>
    %90 = vector.extract_strided_slice %88 {offsets = [0, 32], sizes = [8, 32], strides = [1, 1]} : vector<8x64xf32> to vector<8x32xf32>
    %91 = vector.extract_strided_slice %79 {offsets = [0, 64], sizes = [8, 32], strides = [1, 1]} : vector<8x96xf32> to vector<8x32xf32>
    %92 = vector.extract_strided_slice %80 {offsets = [0, 64], sizes = [8, 32], strides = [1, 1]} : vector<8x96xf32> to vector<8x32xf32>
    %93 = vector.broadcast %51 : vector<1x32xf32> to vector<8x32xf32>
    %94 = arith.addf %92, %93 : vector<8x32xf32>
    %95 = arith.mulf %89, %94 : vector<8x32xf32>
    %96 = arith.addf %91, %95 : vector<8x32xf32>
    %97 = math.tanh %96 : vector<8x32xf32>
    %98 = arith.subf %78, %97 : vector<8x32xf32>
    %99 = arith.mulf %90, %98 : vector<8x32xf32>
    %100 = arith.addf %97, %99 : vector<8x32xf32>
    %101 = tpu.concatenate %78, %100 in 0 : vector<8x32xf32>, vector<8x32xf32> -> vector<16x32xf32>
    %c1_39 = arith.constant 1 : index
    %c0_40 = arith.constant 0 : index
    %c0_41 = arith.constant 0 : index
    %102 = vector.load %arg5[%c1_39, %c0_40, %c0_41] : memref<2x72x96xf32, #tpu.memory_space<vmem>>, vector<1x72x96xf32>
    %103 = vector.shape_cast %102 : vector<1x72x96xf32> to vector<72x96xf32>
    %104 = vector.extract_strided_slice %103 {offsets = [0, 0], sizes = [32, 96], strides = [1, 1]} : vector<72x96xf32> to vector<32x96xf32>
    %105 = vector.extract_strided_slice %103 {offsets = [32, 0], sizes = [32, 96], strides = [1, 1]} : vector<72x96xf32> to vector<32x96xf32>
    %106 = vector.extract_strided_slice %103 {offsets = [64, 0], sizes = [1, 96], strides = [1, 1]} : vector<72x96xf32> to vector<1x96xf32>
    %107 = vector.extract_strided_slice %103 {offsets = [65, 64], sizes = [1, 32], strides = [1, 1]} : vector<72x96xf32> to vector<1x32xf32>
    %cst_42 = arith.constant dense<0.000000e+00> : vector<16x96xf32>
    %108 = tpu.matmul %101, %104, %cst_42 {dimension_numbers = #tpu.dot_dimension_numbers<[1], [0], [0], [1], [0, 0, 1, 1], [], []>} : vector<16x32xf32>, vector<32x96xf32>, vector<16x96xf32> -> vector<16x96xf32>
    %109 = vector.broadcast %106 : vector<1x96xf32> to vector<16x96xf32>
    %110 = arith.addf %108, %109 : vector<16x96xf32>
    %c1_43 = arith.constant 1 : index
    %c0_44 = arith.constant 0 : index
    %c0_45 = arith.constant 0 : index
    %111 = vector.load %arg3[%c1_43, %c0_44, %c0_45] : memref<2x8x32xf32, #tpu.memory_space<vmem>>, vector<1x8x32xf32>
    %112 = vector.shape_cast %111 : vector<1x8x32xf32> to vector<8x32xf32>
    %113 = vector.extract_strided_slice %110 {offsets = [0, 0], sizes = [8, 96], strides = [1, 1]} : vector<16x96xf32> to vector<8x96xf32>
    %cst_46 = arith.constant dense<0.000000e+00> : vector<8x96xf32>
    %114 = tpu.matmul %112, %105, %cst_46 {dimension_numbers = #tpu.dot_dimension_numbers<[1], [0], [0], [1], [0, 0, 1, 1], [], []>} : vector<8x32xf32>, vector<32x96xf32>, vector<8x96xf32> -> vector<8x96xf32>
    %115 = vector.extract_strided_slice %113 {offsets = [0, 0], sizes = [8, 64], strides = [1, 1]} : vector<8x96xf32> to vector<8x64xf32>
    %116 = vector.extract_strided_slice %114 {offsets = [0, 0], sizes = [8, 64], strides = [1, 1]} : vector<8x96xf32> to vector<8x64xf32>
    %117 = arith.addf %115, %116 : vector<8x64xf32>
    %118 = arith.negf %117 : vector<8x64xf32>
    %119 = math.exp %118 : vector<8x64xf32>
    %cst_47 = arith.constant 1.000000e+00 : f32
    %120 = vector.broadcast %cst_47 : f32 to vector<8x64xf32>
    %121 = arith.addf %120, %119 : vector<8x64xf32>
    %122 = arith.divf %120, %121 : vector<8x64xf32>
    %123 = vector.extract_strided_slice %122 {offsets = [0, 0], sizes = [8, 32], strides = [1, 1]} : vector<8x64xf32> to vector<8x32xf32>
    %124 = vector.extract_strided_slice %122 {offsets = [0, 32], sizes = [8, 32], strides = [1, 1]} : vector<8x64xf32> to vector<8x32xf32>
    %125 = vector.extract_strided_slice %113 {offsets = [0, 64], sizes = [8, 32], strides = [1, 1]} : vector<8x96xf32> to vector<8x32xf32>
    %126 = vector.extract_strided_slice %114 {offsets = [0, 64], sizes = [8, 32], strides = [1, 1]} : vector<8x96xf32> to vector<8x32xf32>
    %127 = vector.broadcast %107 : vector<1x32xf32> to vector<8x32xf32>
    %128 = arith.addf %126, %127 : vector<8x32xf32>
    %129 = arith.mulf %123, %128 : vector<8x32xf32>
    %130 = arith.addf %125, %129 : vector<8x32xf32>
    %131 = math.tanh %130 : vector<8x32xf32>
    %132 = arith.subf %112, %131 : vector<8x32xf32>
    %133 = arith.mulf %124, %132 : vector<8x32xf32>
    %134 = arith.addf %131, %133 : vector<8x32xf32>
    %135 = vector.extract_strided_slice %110 {offsets = [8, 0], sizes = [8, 96], strides = [1, 1]} : vector<16x96xf32> to vector<8x96xf32>
    %cst_48 = arith.constant dense<0.000000e+00> : vector<8x96xf32>
    %136 = tpu.matmul %134, %105, %cst_48 {dimension_numbers = #tpu.dot_dimension_numbers<[1], [0], [0], [1], [0, 0, 1, 1], [], []>} : vector<8x32xf32>, vector<32x96xf32>, vector<8x96xf32> -> vector<8x96xf32>
    %137 = vector.extract_strided_slice %135 {offsets = [0, 0], sizes = [8, 64], strides = [1, 1]} : vector<8x96xf32> to vector<8x64xf32>
    %138 = vector.extract_strided_slice %136 {offsets = [0, 0], sizes = [8, 64], strides = [1, 1]} : vector<8x96xf32> to vector<8x64xf32>
    %139 = arith.addf %137, %138 : vector<8x64xf32>
    %140 = arith.negf %139 : vector<8x64xf32>
    %141 = math.exp %140 : vector<8x64xf32>
    %cst_49 = arith.constant 1.000000e+00 : f32
    %142 = vector.broadcast %cst_49 : f32 to vector<8x64xf32>
    %143 = arith.addf %142, %141 : vector<8x64xf32>
    %144 = arith.divf %142, %143 : vector<8x64xf32>
    %145 = vector.extract_strided_slice %144 {offsets = [0, 0], sizes = [8, 32], strides = [1, 1]} : vector<8x64xf32> to vector<8x32xf32>
    %146 = vector.extract_strided_slice %144 {offsets = [0, 32], sizes = [8, 32], strides = [1, 1]} : vector<8x64xf32> to vector<8x32xf32>
    %147 = vector.extract_strided_slice %135 {offsets = [0, 64], sizes = [8, 32], strides = [1, 1]} : vector<8x96xf32> to vector<8x32xf32>
    %148 = vector.extract_strided_slice %136 {offsets = [0, 64], sizes = [8, 32], strides = [1, 1]} : vector<8x96xf32> to vector<8x32xf32>
    %149 = vector.broadcast %107 : vector<1x32xf32> to vector<8x32xf32>
    %150 = arith.addf %148, %149 : vector<8x32xf32>
    %151 = arith.mulf %145, %150 : vector<8x32xf32>
    %152 = arith.addf %147, %151 : vector<8x32xf32>
    %153 = math.tanh %152 : vector<8x32xf32>
    %154 = arith.subf %134, %153 : vector<8x32xf32>
    %155 = arith.mulf %146, %154 : vector<8x32xf32>
    %156 = arith.addf %153, %155 : vector<8x32xf32>
    %157 = tpu.concatenate %134, %156 in 0 : vector<8x32xf32>, vector<8x32xf32> -> vector<16x32xf32>
    %c0_50 = arith.constant 0 : index
    %c0_51 = arith.constant 0 : index
    %158 = vector.load %arg6[%c0_50, %c0_51] : memref<328x72xf32, #tpu.memory_space<vmem>>, vector<256x72xf32>
    %c256 = arith.constant 256 : index
    %c0_52 = arith.constant 0 : index
    %159 = vector.load %arg6[%c256, %c0_52] : memref<328x72xf32, #tpu.memory_space<vmem>>, vector<64x64xf32>
    %c256_53 = arith.constant 256 : index
    %c64_54 = arith.constant 64 : index
    %160 = vector.load %arg6[%c256_53, %c64_54] : memref<328x72xf32, #tpu.memory_space<vmem>>, vector<64x1xf32>
    %c320 = arith.constant 320 : index
    %c0_55 = arith.constant 0 : index
    %161 = vector.load %arg6[%c320, %c0_55] : memref<328x72xf32, #tpu.memory_space<vmem>>, vector<1x72xf32>
    %c321 = arith.constant 321 : index
    %c0_56 = arith.constant 0 : index
    %162 = vector.load %arg6[%c321, %c0_56] : memref<328x72xf32, #tpu.memory_space<vmem>>, vector<1x64xf32>
    %c322 = arith.constant 322 : index
    %c0_57 = arith.constant 0 : index
    %163 = vector.load %arg6[%c322, %c0_57] : memref<328x72xf32, #tpu.memory_space<vmem>>, vector<1x1xf32>
    %cst_58 = arith.constant dense<0.000000e+00> : vector<16x256xf32>
    %164 = tpu.matmul %157, %2, %cst_58 {dimension_numbers = #tpu.dot_dimension_numbers<[1], [0], [0], [1], [0, 0, 1, 1], [], []>} : vector<16x32xf32>, vector<32x256xf32>, vector<16x256xf32> -> vector<16x256xf32>
    %165 = arith.mulf %164, %3 : vector<16x256xf32>
    %cst_59 = arith.constant dense<0.000000e+00> : vector<2x256xf32>
    %166 = tpu.matmul %4, %165, %cst_59 {dimension_numbers = #tpu.dot_dimension_numbers<[1], [0], [0], [1], [0, 0, 1, 1], [], []>} : vector<2x16xf32>, vector<16x256xf32>, vector<2x256xf32> -> vector<2x256xf32>
    %cst_60 = arith.constant dense<0.000000e+00> : vector<2x72xf32>
    %167 = tpu.matmul %166, %158, %cst_60 {dimension_numbers = #tpu.dot_dimension_numbers<[1], [0], [0], [1], [0, 0, 1, 1], [], []>} : vector<2x256xf32>, vector<256x72xf32>, vector<2x72xf32> -> vector<2x72xf32>
    %168 = vector.broadcast %161 : vector<1x72xf32> to vector<2x72xf32>
    %169 = arith.addf %167, %168 : vector<2x72xf32>
    %cst_61 = arith.constant 0.000000e+00 : f32
    %170 = vector.broadcast %cst_61 : f32 to vector<2x72xf32>
    %171 = arith.maximumf %169, %170 : vector<2x72xf32>
    %172 = vector.extract_strided_slice %171 {offsets = [0, 0], sizes = [2, 8], strides = [1, 1]} : vector<2x72xf32> to vector<2x8xf32>
    %173 = vector.extract_strided_slice %171 {offsets = [0, 8], sizes = [2, 64], strides = [1, 1]} : vector<2x72xf32> to vector<2x64xf32>
    %cst_62 = arith.constant dense<0.000000e+00> : vector<2x64xf32>
    %174 = tpu.matmul %173, %159, %cst_62 {dimension_numbers = #tpu.dot_dimension_numbers<[1], [0], [0], [1], [0, 0, 1, 1], [], []>} : vector<2x64xf32>, vector<64x64xf32>, vector<2x64xf32> -> vector<2x64xf32>
    %175 = vector.broadcast %162 : vector<1x64xf32> to vector<2x64xf32>
    %176 = arith.addf %174, %175 : vector<2x64xf32>
    %cst_63 = arith.constant 0.000000e+00 : f32
    %177 = vector.broadcast %cst_63 : f32 to vector<2x64xf32>
    %178 = arith.maximumf %176, %177 : vector<2x64xf32>
    %cst_64 = arith.constant dense<0.000000e+00> : vector<2x1xf32>
    %179 = tpu.matmul %178, %160, %cst_64 {dimension_numbers = #tpu.dot_dimension_numbers<[1], [0], [0], [1], [0, 0, 1, 1], [], []>} : vector<2x64xf32>, vector<64x1xf32>, vector<2x1xf32> -> vector<2x1xf32>
    %180 = vector.broadcast %163 : vector<1x1xf32> to vector<2x1xf32>
    %181 = arith.addf %179, %180 : vector<2x1xf32>
    %cst_65 = arith.constant dense<0.000000e+00> : vector<2x8xf32>
    %182 = tpu.matmul %172, %5, %cst_65 {dimension_numbers = #tpu.dot_dimension_numbers<[1], [0], [0], [1], [0, 0, 1, 1], [], []>} : vector<2x8xf32>, vector<8x8xf32>, vector<2x8xf32> -> vector<2x8xf32>
    %183 = vector.broadcast %181 : vector<2x1xf32> to vector<2x8xf32>
    %184 = arith.addf %183, %182 : vector<2x8xf32>
    %c0_66 = arith.constant 0 : index
    %c0_67 = arith.constant 0 : index
    %185 = vector.load %arg8[%c0_66, %c0_67] : memref<2x8xf32, #tpu.memory_space<vmem>>, vector<2x8xf32>
    tpu.vector_store %arg8[%c0_66, %c0_67], %184 {strides = array<i32>} : memref<2x8xf32, #tpu.memory_space<vmem>>, vector<2x8xf32>,
    return
  }
}

</mosaic_0001>

<llo_original>
// kernel: tpu_custom_call.1
$region0: #{tpu_custom_call.1}
  #allocation0 [shape = 'u32[]', space=smem, size = 0x4, offset = 0x4, fixed_abs, tag = 'smem constant byte address 0x4 - core index']
  #allocation1 [shape = 'u32[72,128]{1,0:T(1,128)}', space=vmem, size = 0x9000, scoped, tag = 'internal scratch']
  %s0 = inlined_call_operand.vmem [shape: f32[16,4], index: 0, kind: input, shape index: {}]
  %s1 = inlined_call_operand.vmem [shape: s32[16,2], index: 1, kind: input, shape index: {}]
  %s2 = inlined_call_operand.vmem [shape: f32[16,1], index: 2, kind: input, shape index: {}]
  %s3 = inlined_call_operand.vmem [shape: f32[2,8,32], index: 3, kind: input, shape index: {}]
  %s4 = inlined_call_operand.hbm [shape: f32[72,128], index: 4, kind: input, shape index: {}]
  %s5 = inlined_call_operand.vmem [shape: f32[2,72,96], index: 5, kind: input, shape index: {}]
  %s6 = inlined_call_operand.vmem [shape: f32[328,72], index: 6, kind: input, shape index: {}]
  %s7 = inlined_call_operand.vmem [shape: f32[200,256], index: 7, kind: input, shape index: {}]
  %s8 = inlined_call_operand.hbm [shape: f32[2,8], index: 8, kind: output, shape index: {}]
  %s9 = sld [smem:[#allocation0]]
  $region46: #{tpu_custom_call.1} parent=0
    _
  %s11 = ssub.s32 1, %s9
  %s12 = scalar_select 0, %s11, %s9
  $region1: #{tpu_custom_call.1} parent=0
    #allocation2 [shape = 'u8[36864]{0}', space=vmem, size = 0x9000, scoped, tag = 'input window, operand 4, single buffered']
    #allocation3 [shape = 's32[1]{0}', space=sflag, size = 0x4, scoped, tag = 'scoped memory for tpu_custom_call.1']
    #allocation4 [shape = 's32[1]{0}', space=sflag, size = 0x4, scoped, tag = 'scoped memory for tpu_custom_call.1']
    #allocation5 [shape = 'u8[1024]{0}', space=vmem, size = 0x400, scoped, tag = 'output window, operand 0, single buffered']
    %13 = vsyncpa [#allocation3], 0
    %14 = vsyncpa [#allocation4], 0
    // Predicated region
    $region2: #{tpu_custom_call.1} parent=1 // pred_check
      _
    $region3: #{tpu_custom_call.1} parent=1 // pred_check_branch
      %16 = sbr.rel (0) target = $region5
    $region4: #{tpu_custom_call.1} parent=1 // pred_region
      _
    $region5: #{tpu_custom_call.1} parent=1 // pred_fallthru
      _
    // Predicated region
    $region6: #{tpu_custom_call.1} parent=1 // pred_check
      _
    $region7: #{tpu_custom_call.1} parent=1 // pred_check_branch
      %18 = sbr.rel (0) target = $region9
    $region8: #{tpu_custom_call.1} parent=1 // pred_region
      _
    $region9: #{tpu_custom_call.1} parent=1 // pred_fallthru
      _
    // Predicated region
    $region10: #{tpu_custom_call.1} parent=1 // pred_check
      _
    $region11: #{tpu_custom_call.1} parent=1 // pred_check_branch
      %20 = sbr.rel (0) target = $region13
    $region12: #{tpu_custom_call.1} parent=1 // pred_region
      _
    $region13: #{tpu_custom_call.1} parent=1 // pred_fallthru
      _
    // Predicated region
    $region14: #{tpu_custom_call.1} parent=1 // pred_check
      _
    $region15: #{tpu_custom_call.1} parent=1 // pred_check_branch
      %22 = sbr.rel (0) target = $region17
    $region16: #{tpu_custom_call.1} parent=1 // pred_region
      _
    $region17: #{tpu_custom_call.1} parent=1 // pred_fallthru
      _
    // Predicated region
    $region18: #{tpu_custom_call.1} parent=1 // pred_check
      _
    $region19: #{tpu_custom_call.1} parent=1 // pred_check_branch
      %24 = sbr.rel (0) target = $region21
    $region20: #{tpu_custom_call.1} parent=1 // pred_region
      %26 = vsyncadd [#allocation3], 0
      %s27 = sshll.u32 %s4, 4
      %s28 = int_to_ptr.hbm [resolvable:$true] %s27
      %s29 = sshll.u32 [#allocation2], 4
      %s30 = int_to_ptr.vmem [resolvable:$true] %s29
      %35 = dma.hbm_to_vmem [thread:$0]  %s28, 1152, %s30, [#allocation3], 128, 128, 8
    $region21: #{tpu_custom_call.1} parent=1 // pred_fallthru
      _
    // Predicated region
    $region22: #{tpu_custom_call.1} parent=1 // pred_check
      _
    $region23: #{tpu_custom_call.1} parent=1 // pred_check_branch
      %37 = sbr.rel (0) target = $region25
    $region24: #{tpu_custom_call.1} parent=1 // pred_region
      _
    $region25: #{tpu_custom_call.1} parent=1 // pred_fallthru
      _
    // Predicated region
    $region26: #{tpu_custom_call.1} parent=1 // pred_check
      _
    $region27: #{tpu_custom_call.1} parent=1 // pred_check_branch
      %39 = sbr.rel (0) target = $region29
    $region28: #{tpu_custom_call.1} parent=1 // pred_region
      _
    $region29: #{tpu_custom_call.1} parent=1 // pred_fallthru
      _
    // Predicated region
    $region30: #{tpu_custom_call.1} parent=1 // pred_check
      _
    $region31: #{tpu_custom_call.1} parent=1 // pred_check_branch
      %41 = sbr.rel (0) target = $region33
    $region32: #{tpu_custom_call.1} parent=1 // pred_region
      _
    $region33: #{tpu_custom_call.1} parent=1 // pred_fallthru
      _
    // Predicated region
    $region34: #{tpu_custom_call.1} parent=1 // pred_check
      _
    $region35: #{tpu_custom_call.1} parent=1 // pred_check_branch
      %43 = sbr.rel (0) target = $region37
    $region36: #{tpu_custom_call.1} parent=1 // pred_region
      %45 = dma.done [#allocation3], 1152
    $region37: #{tpu_custom_call.1} parent=1 // pred_fallthru
      _
    %v46 = vld [vmem:[%s7 + $0x80] sm:$0xf]
    %v47 = vld [vmem:[%s7 + $0x90] sm:$0xff]
    %v48 = vld [vmem:[%s7 + $0xa0] sm:$0xff]
    %v49 = vld [vmem:[%s7 + $0xb0] sm:$0xff]
    %v50 = vld [vmem:[%s7 + $0xc0] sm:$0xff]
    %v51 = vld [vmem:[%s7 + $0xd0] sm:$0xff]
    %v52 = vld [vmem:[%s7 + $0xe0] sm:$0xff]
    %v53 = vld [vmem:[%s7 + $0xf0] sm:$0xff]
    %v54 = vld [vmem:[%s7 + $0x100] sm:$0xff]
    %v55 = vld [vmem:[%s7 + $0x110] sm:$0xff]
    %v56 = vld [vmem:[%s7 + $0x120] sm:$0xff]
    %v57 = vld [vmem:[%s7 + $0x130] sm:$0xff]
    %v58 = vld [vmem:[%s7 + $0x140] sm:$0xff]
    %v59 = vld [vmem:[%s7 + $0x150] sm:$0xff]
    %v60 = vld [vmem:[%s7 + $0x160] sm:$0xff]
    %v61 = vld [vmem:[%s7 + $0x170] sm:$0xff]
    %v62 = vld [vmem:[%s7 + $0x180] sm:$0xff]
    %v63 = vld [vmem:[%s7 + $0x20] sm:$0xff]
    %v64 = vld [vmem:[%s7 + $0x28] sm:$0xff]
    %v65 = vld [vmem:[%s7 + $0x30] sm:$0xff]
    %v66 = vld [vmem:[%s7 + $0x38] sm:$0xff]
    %v67 = vld [vmem:[%s7 + $0x40] sm:$0xff]
    %v68 = vld [vmem:[%s7 + $0x48] sm:$0xff]
    %v69 = vld [vmem:[%s7 + $0x50] sm:$0xff]
    %v70 = vld [vmem:[%s7 + $0x58] sm:$0xff]
    %v71 = vld [vmem:[%s7] sm:$0xff]
    %v72 = vld [vmem:[%s7 + $0x8] sm:$0xff]
    %v73 = vld [vmem:[%s7 + $0x10] sm:$0xff]
    %v74 = vld [vmem:[%s7 + $0x18] sm:$0xff]
    %v75 = vld [vmem:[%s7 + $0x60] sm:$0x3]
    %v76 = vld [vmem:[%s7 + $0x70] sm:$0xff]
    %v77 = vld [vmem:[%s0] sm:$0xff]
    %v78 = vld [vmem:[%s0 + $0x8] sm:$0xff]
    %v79 = vld [vmem:[%s2] sm:$0xff]
    %v80 = vld [vmem:[%s2 + $0x8] sm:$0xff]
    %v81 = vld [vmem:[%s1] sm:$0xff]
    %v82 = vld [vmem:[%s1 + $0x8] sm:$0xff]
    %v83 = vlaneseq
    %v84 = vand.u32 %v83, 127
    %85 = vset.pattern.permute.xlu0 0
    %86 = vperm.xlu0 %85, %v81
    %v87 = vpop.permute.xlu0 %86
    %88 = vset.pattern.permute.xlu0 0
    %89 = vperm.xlu0 %88, %v82
    %v90 = vpop.permute.xlu0 %89
    %vm91 = vcmp.eq.s32.totalorder %v87, %v84
    %vm92 = vcmp.eq.s32.totalorder %v90, %v84
    %v93 = vsel %vm91, 1, 0
    %v94 = vsel %vm92, 1, 0
    %v95 = vcvt.s32.f32 %v93
    %v96 = vcvt.s32.f32 %v94
    %97 = vset.pattern.permute.xlu0 1
    %98 = vperm.xlu0 %97, %v81
    %v99 = vpop.permute.xlu0 %98
    %100 = vset.pattern.permute.xlu0 1
    %101 = vperm.xlu0 %100, %v82
    %v102 = vpop.permute.xlu0 %101
    %vm103 = vcmp.eq.s32.totalorder %v99, %v84
    %vm104 = vcmp.eq.s32.totalorder %v102, %v84
    %v105 = vsel %vm103, 1, 0
    %v106 = vsel %vm104, 1, 0
    %v107 = vcvt.s32.f32 %v105
    %v108 = vcvt.s32.f32 %v106
    %v109 = vld [vmem:[#allocation2] sm:$0x1]
    %v110 = vld [vmem:[#allocation2 + $0x1] sm:$0x1]
    %v111 = vld [vmem:[#allocation2 + $0x2] sm:$0x1]
    %v112 = vld [vmem:[#allocation2 + $0x3] sm:$0x1]
    %v113 = vld [vmem:[#allocation2 + $0x4] sm:$0xf]
    %v114 = vld [vmem:[#allocation2 + $0x8] sm:$0xff]
    %v115 = vld [vmem:[#allocation2 + $0x10] sm:$0xff]
    %v116 = vld [vmem:[#allocation2 + $0x18] sm:$0xff]
    %v117 = vld [vmem:[#allocation2 + $0x20] sm:$0xff]
    %v118 = vld [vmem:[#allocation2 + $0x28] sm:$0xff]
    %v119 = vld [vmem:[#allocation2 + $0x30] sm:$0xff]
    %v120 = vld [vmem:[#allocation2 + $0x38] sm:$0xff]
    %v121 = vld [vmem:[#allocation2 + $0x40] sm:$0xff]
    %123 = vset.pattern.permute.xlu0 0
    %124 = vperm.xlu0 %123, %v79
    %v125 = vpop.permute.xlu0 %124
    %128 = vset.pattern.permute.xlu0 0
    %129 = vperm.xlu0 %128, %v80
    %v130 = vpop.permute.xlu0 %129
    %v132 = vperm.slane %v109, 0
    %v133 = vmul.f32 %v125, %v132
    %v134 = vmul.f32 %v130, %v132
    %v135 = vperm.slane %v110, 0
    %v136 = vadd.f32 %v133, %v135
    %v137 = vadd.f32 %v134, %v135
    %v138 = vmax.f32 %v136, 0.0
    %v139 = vmax.f32 %v137, 0.0
    %v140 = vperm.slane %v111, 0
    %vm141 = vcmask 523264
    %v143 = vsel %vm141, %v138, 0
    %v146 = vsel %vm141, %v139, 0
    %148 = vmatpush.msra.mxu0 0.0
    %149 = vmatpush.msra.mxu0 0.0
    %150 = vmatpush.msra.mxu0 0.0
    %151 = vmatpush.msra.mxu0 0.0
    %152 = vmatpush.msra.mxu0 0.0
    %153 = vmatpush.msra.mxu0 0.0
    %154 = vmatpush.msra.mxu0 0.0
    %155 = vmatpush.msra.mxu0 0.0
    %156 = vmatpush.msra.mxu0 %v121
    %157 = vmatpush.msra.mxu0 %v120
    %158 = vmatpush.msra.mxu0 %v119
    %159 = vmatpush.msra.mxu0 %v118
    %160 = vmatpush.msra.mxu0 %v117
    %161 = vmatpush.msra.mxu0 %v116
    %162 = vmatpush.msra.mxu0 %v115
    %163 = vmatpush.msra.mxu0 %v114
    %164 = vmatmul.f32.gmra.mxu0 %v143
    %v165 = vpop.f32.mrf.mxu0
    %v166 = vadd.f32 %v140, %v165
    %167 = vmatmul.f32.gmra.mxu0 %v146
    %v168 = vpop.f32.mrf.mxu0
    %v169 = vadd.f32 %v140, %v168
    %170 = vdwg.mxu0
    %vm171 = vcmask 130048
    %v173 = vsel %vm171, %v95, 0
    %v176 = vsel %vm171, %v96, 0
    %178 = vmatpush.msra.mxu0 0.0
    %179 = vmatpush.msra.mxu0 0.0
    %180 = vmatpush.msra.mxu0 0.0
    %181 = vmatpush.msra.mxu0 0.0
    %182 = vmatpush.msra.mxu0 0.0
    %183 = vmatpush.msra.mxu0 0.0
    %184 = vmatpush.msra.mxu0 0.0
    %185 = vmatpush.msra.mxu0 0.0
    %186 = vmatpush.msra.mxu0 0.0
    %187 = vmatpush.msra.mxu0 0.0
    %188 = vmatpush.msra.mxu0 0.0
    %189 = vmatpush.msra.mxu0 0.0
    %190 = vmatpush.msra.mxu0 0.0
    %191 = vmatpush.msra.mxu0 0.0
    %192 = vmatpush.msra.mxu0 %v78
    %193 = vmatpush.msra.mxu0 %v77
    %194 = vmatmul.f32.gmra.mxu0 %v173
    %v195 = vpop.f32.mrf.mxu0
    %v196 = vadd.f32 0.0, %v195
    %197 = vmatmul.f32.gmra.mxu0 %v176
    %v198 = vpop.f32.mrf.mxu0
    %v199 = vadd.f32 0.0, %v198
    %200 = vdwg.mxu0
    %vm201 = vcmask 31744
    %v203 = vsel %vm201, %v196, 0
    %v206 = vsel %vm201, %v199, 0
    %vm208 = vcmask 1043456
    %v210 = vsel %vm208, %v46, 0
    %212 = vmatpush.msra.mxu0 0.0
    %213 = vmatpush.msra.mxu0 0.0
    %214 = vmatpush.msra.mxu0 0.0
    %215 = vmatpush.msra.mxu0 0.0
    %216 = vmatpush.msra.mxu0 0.0
    %217 = vmatpush.msra.mxu0 0.0
    %218 = vmatpush.msra.mxu0 0.0
    %219 = vmatpush.msra.mxu0 0.0
    %220 = vmatpush.msra.mxu0 0.0
    %221 = vmatpush.msra.mxu0 0.0
    %222 = vmatpush.msra.mxu0 0.0
    %223 = vmatpush.msra.mxu0 0.0
    %224 = vmatpush.msra.mxu0 0.0
    %225 = vmatpush.msra.mxu0 0.0
    %226 = vmatpush.msra.mxu0 0.0
    %227 = vmatpush.msra.mxu0 %v210
    %228 = vmatmul.f32.gmra.mxu0 %v203
    %v229 = vpop.f32.mrf.mxu0
    %v230 = vadd.f32 0.0, %v229
    %231 = vmatmul.f32.gmra.mxu0 %v206
    %v232 = vpop.f32.mrf.mxu0
    %v233 = vadd.f32 0.0, %v232
    %234 = vdwg.mxu0
    %v235 = vmul.f32 %v230, %v166
    %v236 = vmul.f32 %v233, %v169
    %237 = vxpose.xlu0.b32.start [1/16] %v107, 128
    %238 = vxpose.xlu0.b32.cont [2/16] %v108, 128
    %239 = vxpose.xlu0.b32.cont [3/16] 0.0, 128
    %240 = vxpose.xlu0.b32.cont [4/16] 0.0, 128
    %241 = vxpose.xlu0.b32.cont [5/16] 0.0, 128
    %242 = vxpose.xlu0.b32.cont [6/16] 0.0, 128
    %243 = vxpose.xlu0.b32.cont [7/16] 0.0, 128
    %244 = vxpose.xlu0.b32.cont [8/16] 0.0, 128
    %245 = vxpose.xlu0.b32.cont [9/16] 0.0, 128
    %246 = vxpose.xlu0.b32.cont [10/16] 0.0, 128
    %247 = vxpose.xlu0.b32.cont [11/16] 0.0, 128
    %248 = vxpose.xlu0.b32.cont [12/16] 0.0, 128
    %249 = vxpose.xlu0.b32.cont [13/16] 0.0, 128
    %250 = vxpose.xlu0.b32.cont [14/16] 0.0, 128
    %251 = vxpose.xlu0.b32.cont [15/16] 0.0, 128
    %252 = vxpose.xlu0.b32.end [16/16] 0.0, 128
    %v253 = vpop.trf.xlu0
    %v254 = vpop.trf.xlu0
    %v255 = vpop.trf.xlu0
    %v256 = vpop.trf.xlu0
    %v257 = vpop.trf.xlu0
    %v258 = vpop.trf.xlu0
    %v259 = vpop.trf.xlu0
    %v260 = vpop.trf.xlu0
    %v261 = vpop.trf.xlu0
    %v262 = vpop.trf.xlu0
    %v263 = vpop.trf.xlu0
    %v264 = vpop.trf.xlu0
    %v265 = vpop.trf.xlu0
    %v266 = vpop.trf.xlu0
    %v267 = vpop.trf.xlu0
    %v268 = vpop.trf.xlu0
    %v270 = vsel %vm171, %v253, 0
    %v273 = vsel %vm171, %v254, 0
    %275 = vmatpush.msra.mxu0 0.0
    %276 = vmatpush.msra.mxu0 0.0
    %277 = vmatpush.msra.mxu0 0.0
    %278 = vmatpush.msra.mxu0 0.0
    %279 = vmatpush.msra.mxu0 0.0
    %280 = vmatpush.msra.mxu0 0.0
    %281 = vmatpush.msra.mxu0 0.0
    %282 = vmatpush.msra.mxu0 0.0
    %283 = vmatpush.msra.mxu0 0.0
    %284 = vmatpush.msra.mxu0 0.0
    %285 = vmatpush.msra.mxu0 0.0
    %286 = vmatpush.msra.mxu0 0.0
    %287 = vmatpush.msra.mxu0 0.0
    %288 = vmatpush.msra.mxu0 0.0
    %289 = vmatpush.msra.mxu0 %v236
    %290 = vmatpush.msra.mxu0 %v235
    %291 = vmatmul.f32.gmra.mxu0 %v270
    %v292 = vpop.f32.mrf.mxu0
    %v293 = vadd.f32 0.0, %v292
    %294 = vmatmul.f32.gmra.mxu0 %v273
    %v295 = vpop.f32.mrf.mxu0
    %v296 = vadd.f32 0.0, %v295
    %297 = vdwg.mxu0
    %v299 = vsel %vm201, %v77, 0
    %v302 = vsel %vm201, %v78, 0
    %v305 = vsel %vm208, %v113, 0
    %307 = vmatpush.msra.mxu0 0.0
    %308 = vmatpush.msra.mxu0 0.0
    %309 = vmatpush.msra.mxu0 0.0
    %310 = vmatpush.msra.mxu0 0.0
    %311 = vmatpush.msra.mxu0 0.0
    %312 = vmatpush.msra.mxu0 0.0
    %313 = vmatpush.msra.mxu0 0.0
    %314 = vmatpush.msra.mxu0 0.0
    %315 = vmatpush.msra.mxu0 0.0
    %316 = vmatpush.msra.mxu0 0.0
    %317 = vmatpush.msra.mxu0 0.0
    %318 = vmatpush.msra.mxu0 0.0
    %319 = vmatpush.msra.mxu0 0.0
    %320 = vmatpush.msra.mxu0 0.0
    %321 = vmatpush.msra.mxu0 0.0
    %322 = vmatpush.msra.mxu0 %v305
    %323 = vmatmul.f32.gmra.mxu0 %v299
    %v324 = vpop.f32.mrf.mxu0
    %v325 = vadd.f32 0.0, %v324
    %326 = vmatmul.f32.gmra.mxu0 %v302
    %v327 = vpop.f32.mrf.mxu0
    %v328 = vadd.f32 0.0, %v327
    %329 = vdwg.mxu0
    %330 = vmatpush.msra.mxu0 %v62
    %331 = vmatpush.msra.mxu0 %v61
    %332 = vmatpush.msra.mxu0 %v60
    %333 = vmatpush.msra.mxu0 %v59
    %334 = vmatpush.msra.mxu0 %v58
    %335 = vmatpush.msra.mxu0 %v57
    %336 = vmatpush.msra.mxu0 %v56
    %337 = vmatpush.msra.mxu0 %v55
    %338 = vmatpush.msra.mxu0 %v54
    %339 = vmatpush.msra.mxu0 %v53
    %340 = vmatpush.msra.mxu0 %v52
    %341 = vmatpush.msra.mxu0 %v51
    %342 = vmatpush.msra.mxu0 %v50
    %343 = vmatpush.msra.mxu0 %v49
    %344 = vmatpush.msra.mxu0 %v48
    %345 = vmatpush.msra.mxu0 %v47
    %346 = vmatmul.f32.gmra.mxu0 %v293
    %v347 = vpop.f32.mrf.mxu0
    %v348 = vadd.f32 %v325, %v347
    %349 = vmatmul.f32.gmra.mxu0 %v296
    %v350 = vpop.f32.mrf.mxu0
    %v351 = vadd.f32 %v328, %v350
    %352 = vdwg.mxu0
    %v353 = vperm.slane %v112, 0
    %v354 = vadd.f32 %v348, %v353
    %v355 = vadd.f32 %v351, %v353
    %v356 = vmax.f32 %v354, 0.0
    %v357 = vmax.f32 %v355, 0.0
    %v358 = vld [vmem:[%s5] sm:$0xff]
    %v359 = vld [vmem:[%s5 + $0x8] sm:$0xff]
    %v360 = vld [vmem:[%s5 + $0x10] sm:$0xff]
    %v361 = vld [vmem:[%s5 + $0x18] sm:$0xff]
    %v362 = vld [vmem:[%s5 + $0x20] sm:$0xff]
    %v363 = vld [vmem:[%s5 + $0x28] sm:$0xff]
    %v364 = vld [vmem:[%s5 + $0x30] sm:$0xff]
    %v365 = vld [vmem:[%s5 + $0x38] sm:$0xff]
    %v366 = vld [vmem:[%s5 + $0x40] sm:$0xff]
    %v367 = vperm.slane %v366, 0
    %vm368 = vcmask 261120
    %v370 = vsel %vm368, %v356, 0
    %v373 = vsel %vm368, %v357, 0
    %375 = vmatpush.msra.mxu0 0.0
    %376 = vmatpush.msra.mxu0 0.0
    %377 = vmatpush.msra.mxu0 0.0
    %378 = vmatpush.msra.mxu0 0.0
    %379 = vmatpush.msra.mxu0 0.0
    %380 = vmatpush.msra.mxu0 0.0
    %381 = vmatpush.msra.mxu0 0.0
    %382 = vmatpush.msra.mxu0 0.0
    %383 = vmatpush.msra.mxu0 0.0
    %384 = vmatpush.msra.mxu0 0.0
    %385 = vmatpush.msra.mxu0 0.0
    %386 = vmatpush.msra.mxu0 0.0
    %387 = vmatpush.msra.mxu0 %v361
    %388 = vmatpush.msra.mxu0 %v360
    %389 = vmatpush.msra.mxu0 %v359
    %390 = vmatpush.msra.mxu0 %v358
    %391 = vmatmul.f32.gmra.mxu0 %v370
    %v392 = vpop.f32.mrf.mxu0
    %v393 = vadd.f32 %v367, %v392
    %394 = vmatmul.f32.gmra.mxu0 %v373
    %v395 = vpop.f32.mrf.mxu0
    %v396 = vadd.f32 %v367, %v395
    %397 = vdwg.mxu0
    %v398 = vld [vmem:[%s3] sm:$0xff]
    %v400 = vsel %vm368, %v398, 0
    %402 = vmatpush.msra.mxu0 0.0
    %403 = vmatpush.msra.mxu0 0.0
    %404 = vmatpush.msra.mxu0 0.0
    %405 = vmatpush.msra.mxu0 0.0
    %406 = vmatpush.msra.mxu0 0.0
    %407 = vmatpush.msra.mxu0 0.0
    %408 = vmatpush.msra.mxu0 0.0
    %409 = vmatpush.msra.mxu0 0.0
    %410 = vmatpush.msra.mxu0 0.0
    %411 = vmatpush.msra.mxu0 0.0
    %412 = vmatpush.msra.mxu0 0.0
    %413 = vmatpush.msra.mxu0 0.0
    %414 = vmatpush.msra.mxu0 %v365
    %415 = vmatpush.msra.mxu0 %v364
    %416 = vmatpush.msra.mxu0 %v363
    %417 = vmatpush.msra.mxu0 %v362
    %418 = vmatmul.f32.gmra.mxu0 %v400
    %v419 = vpop.f32.mrf.mxu0
    %v420 = vadd.f32 0.0, %v419
    %421 = vdwg.mxu0
    %v422 = vadd.f32 %v393, %v420
    %v423 = vxor.u32 %v422, 2147483648
    %v424 = vmul.f32 %v423, 1.442695
    %v425 = vpow.pop %v424
    %v426 = vadd.f32 %v425, 1.0
    %v427 = vrcp.pop %v426
    %v428 = vmul.f32 %v426, %v427
    %v429 = vsub.f32 1.0, %v428
    %v430 = vmul.f32 %v427, %v429
    %v431 = vadd.f32 %v427, %v430
    %vm432 = vweird.f32 %v426
    %vm433 = vweird.f32 %v427
    %vm434 = vmor %vm432, %vm433
    %v435 = vsel %vm434, %v427, %v431
    %v436 = vand.u32 2147483647, %v426
    %vm437 = vcmp.eq.f32.partialorder %v436, 8.507059e+37
    %v438 = vand.u32 %v426, 2147483648
    %v439 = vor.u32 1.1754944e-38, %v438
    %v440 = vsel %vm437, %v439, %v435
    %v441 = vmul.f32 1.0, %v440
    %v442 = vperm.slane %v366, 1
    %v443 = vadd.f32 %v420, %v442
    %445 = vrot.lane.b32.xlu0 %v443, 64
    %v446 = vpop.permute.xlu0 %445
    %v448 = vmul.f32 %v441, %v446
    %450 = vrot.lane.b32.xlu0 %v448, 64
    %v451 = vpop.permute.xlu0 %450
    %v453 = vadd.f32 %v393, %v451
    %v454 = vtanh.pop %v453
    %456 = vrot.lane.b32.xlu0 %v454, 64
    %v457 = vpop.permute.xlu0 %456
    %v459 = vsub.f32 %v398, %v457
    %461 = vrot.lane.b32.xlu0 %v459, 32
    %v462 = vpop.permute.xlu0 %461
    %v464 = vmul.f32 %v441, %v462
    %466 = vrot.lane.b32.xlu0 %v464, 32
    %v467 = vpop.permute.xlu0 %466
    %v469 = vadd.f32 %v454, %v467
    %471 = vrot.lane.b32.xlu0 %v469, 64
    %v472 = vpop.permute.xlu0 %471
    %v473 = vsel %vm368, %v472, 0
    %475 = vmatpush.msra.mxu0 0.0
    %476 = vmatpush.msra.mxu0 0.0
    %477 = vmatpush.msra.mxu0 0.0
    %478 = vmatpush.msra.mxu0 0.0
    %479 = vmatpush.msra.mxu0 0.0
    %480 = vmatpush.msra.mxu0 0.0
    %481 = vmatpush.msra.mxu0 0.0
    %482 = vmatpush.msra.mxu0 0.0
    %483 = vmatpush.msra.mxu0 0.0
    %484 = vmatpush.msra.mxu0 0.0
    %485 = vmatpush.msra.mxu0 0.0
    %486 = vmatpush.msra.mxu0 0.0
    %487 = vmatpush.msra.mxu0 %v365
    %488 = vmatpush.msra.mxu0 %v364
    %489 = vmatpush.msra.mxu0 %v363
    %490 = vmatpush.msra.mxu0 %v362
    %491 = vmatmul.f32.gmra.mxu0 %v473
    %v492 = vpop.f32.mrf.mxu0
    %v493 = vadd.f32 0.0, %v492
    %494 = vdwg.mxu0
    %v495 = vadd.f32 %v396, %v493
    %v496 = vxor.u32 %v495, 2147483648
    %v497 = vmul.f32 %v496, 1.442695
    %v498 = vpow.pop %v497
    %v499 = vadd.f32 %v498, 1.0
    %v500 = vrcp.pop %v499
    %v501 = vmul.f32 %v499, %v500
    %v502 = vsub.f32 1.0, %v501
    %v503 = vmul.f32 %v500, %v502
    %v504 = vadd.f32 %v500, %v503
    %vm505 = vweird.f32 %v499
    %vm506 = vweird.f32 %v500
    %vm507 = vmor %vm505, %vm506
    %v508 = vsel %vm507, %v500, %v504
    %v509 = vand.u32 2147483647, %v499
    %vm510 = vcmp.eq.f32.partialorder %v509, 8.507059e+37
    %v511 = vand.u32 %v499, 2147483648
    %v512 = vor.u32 1.1754944e-38, %v511
    %v513 = vsel %vm510, %v512, %v508
    %v514 = vmul.f32 1.0, %v513
    %v515 = vadd.f32 %v493, %v442
    %517 = vrot.lane.b32.xlu0 %v515, 64
    %v518 = vpop.permute.xlu0 %517
    %v520 = vmul.f32 %v514, %v518
    %522 = vrot.lane.b32.xlu0 %v520, 64
    %v523 = vpop.permute.xlu0 %522
    %v525 = vadd.f32 %v396, %v523
    %v526 = vtanh.pop %v525
    %v527 = vsub.f32 %v469, %v526
    %529 = vrot.lane.b32.xlu0 %v527, 96
    %v530 = vpop.permute.xlu0 %529
    %v532 = vmul.f32 %v514, %v530
    %534 = vrot.lane.b32.xlu0 %v532, 32
    %v535 = vpop.permute.xlu0 %534
    %v537 = vadd.f32 %v526, %v535
    %s538 = scalar_lea.vmem %s5, 72
    %v539 = vld [vmem:[%s538] sm:$0xff]
    %v540 = vld [vmem:[%s538 + $0x8] sm:$0xff]
    %v541 = vld [vmem:[%s538 + $0x10] sm:$0xff]
    %v542 = vld [vmem:[%s538 + $0x18] sm:$0xff]
    %v543 = vld [vmem:[%s538 + $0x20] sm:$0xff]
    %v544 = vld [vmem:[%s538 + $0x28] sm:$0xff]
    %v545 = vld [vmem:[%s538 + $0x30] sm:$0xff]
    %v546 = vld [vmem:[%s538 + $0x38] sm:$0xff]
    %v547 = vld [vmem:[%s538 + $0x40] sm:$0xff]
    %v548 = vperm.slane %v547, 0
    %550 = vrot.lane.b32.xlu0 %v537, 64
    %v551 = vpop.permute.xlu0 %550
    %v552 = vsel %vm368, %v551, 0
    %554 = vmatpush.msra.mxu0 0.0
    %555 = vmatpush.msra.mxu0 0.0
    %556 = vmatpush.msra.mxu0 0.0
    %557 = vmatpush.msra.mxu0 0.0
    %558 = vmatpush.msra.mxu0 0.0
    %559 = vmatpush.msra.mxu0 0.0
    %560 = vmatpush.msra.mxu0 0.0
    %561 = vmatpush.msra.mxu0 0.0
    %562 = vmatpush.msra.mxu0 0.0
    %563 = vmatpush.msra.mxu0 0.0
    %564 = vmatpush.msra.mxu0 0.0
    %565 = vmatpush.msra.mxu0 0.0
    %566 = vmatpush.msra.mxu0 %v542
    %567 = vmatpush.msra.mxu0 %v541
    %568 = vmatpush.msra.mxu0 %v540
    %569 = vmatpush.msra.mxu0 %v539
    %570 = vmatmul.f32.gmra.mxu0 %v473
    %v571 = vpop.f32.mrf.mxu0
    %v572 = vadd.f32 %v548, %v571
    %573 = vmatmul.f32.gmra.mxu0 %v552
    %v574 = vpop.f32.mrf.mxu0
    %v575 = vadd.f32 %v548, %v574
    %576 = vdwg.mxu0
    %s577 = scalar_lea.vmem %s3, 8
    %v578 = vld [vmem:[%s577] sm:$0xff]
    %v580 = vsel %vm368, %v578, 0
    %582 = vmatpush.msra.mxu0 0.0
    %583 = vmatpush.msra.mxu0 0.0
    %584 = vmatpush.msra.mxu0 0.0
    %585 = vmatpush.msra.mxu0 0.0
    %586 = vmatpush.msra.mxu0 0.0
    %587 = vmatpush.msra.mxu0 0.0
    %588 = vmatpush.msra.mxu0 0.0
    %589 = vmatpush.msra.mxu0 0.0
    %590 = vmatpush.msra.mxu0 0.0
    %591 = vmatpush.msra.mxu0 0.0
    %592 = vmatpush.msra.mxu0 0.0
    %593 = vmatpush.msra.mxu0 0.0
    %594 = vmatpush.msra.mxu0 %v546
    %595 = vmatpush.msra.mxu0 %v545
    %596 = vmatpush.msra.mxu0 %v544
    %597 = vmatpush.msra.mxu0 %v543
    %598 = vmatmul.f32.gmra.mxu0 %v580
    %v599 = vpop.f32.mrf.mxu0
    %v600 = vadd.f32 0.0, %v599
    %601 = vdwg.mxu0
    %v602 = vadd.f32 %v572, %v600
    %v603 = vxor.u32 %v602, 2147483648
    %v604 = vmul.f32 %v603, 1.442695
    %v605 = vpow.pop %v604
    %v606 = vadd.f32 %v605, 1.0
    %v607 = vrcp.pop %v606
    %v608 = vmul.f32 %v606, %v607
    %v609 = vsub.f32 1.0, %v608
    %v610 = vmul.f32 %v607, %v609
    %v611 = vadd.f32 %v607, %v610
    %vm612 = vweird.f32 %v606
    %vm613 = vweird.f32 %v607
    %vm614 = vmor %vm612, %vm613
    %v615 = vsel %vm614, %v607, %v611
    %v616 = vand.u32 2147483647, %v606
    %vm617 = vcmp.eq.f32.partialorder %v616, 8.507059e+37
    %v618 = vand.u32 %v606, 2147483648
    %v619 = vor.u32 1.1754944e-38, %v618
    %v620 = vsel %vm617, %v619, %v615
    %v621 = vmul.f32 1.0, %v620
    %v622 = vperm.slane %v547, 1
    %v623 = vadd.f32 %v600, %v622
    %625 = vrot.lane.b32.xlu0 %v623, 64
    %v626 = vpop.permute.xlu0 %625
    %v628 = vmul.f32 %v621, %v626
    %630 = vrot.lane.b32.xlu0 %v628, 64
    %v631 = vpop.permute.xlu0 %630
    %v633 = vadd.f32 %v572, %v631
    %v634 = vtanh.pop %v633
    %636 = vrot.lane.b32.xlu0 %v634, 64
    %v637 = vpop.permute.xlu0 %636
    %v639 = vsub.f32 %v578, %v637
    %641 = vrot.lane.b32.xlu0 %v639, 32
    %v642 = vpop.permute.xlu0 %641
    %v644 = vmul.f32 %v621, %v642
    %646 = vrot.lane.b32.xlu0 %v644, 32
    %v647 = vpop.permute.xlu0 %646
    %v649 = vadd.f32 %v634, %v647
    %651 = vrot.lane.b32.xlu0 %v649, 64
    %v652 = vpop.permute.xlu0 %651
    %v653 = vsel %vm368, %v652, 0
    %655 = vmatpush.msra.mxu0 0.0
    %656 = vmatpush.msra.mxu0 0.0
    %657 = vmatpush.msra.mxu0 0.0
    %658 = vmatpush.msra.mxu0 0.0
    %659 = vmatpush.msra.mxu0 0.0
    %660 = vmatpush.msra.mxu0 0.0
    %661 = vmatpush.msra.mxu0 0.0
    %662 = vmatpush.msra.mxu0 0.0
    %663 = vmatpush.msra.mxu0 0.0
    %664 = vmatpush.msra.mxu0 0.0
    %665 = vmatpush.msra.mxu0 0.0
    %666 = vmatpush.msra.mxu0 0.0
    %667 = vmatpush.msra.mxu0 %v546
    %668 = vmatpush.msra.mxu0 %v545
    %669 = vmatpush.msra.mxu0 %v544
    %670 = vmatpush.msra.mxu0 %v543
    %671 = vmatmul.f32.gmra.mxu0 %v653
    %v672 = vpop.f32.mrf.mxu0
    %v673 = vadd.f32 0.0, %v672
    %674 = vdwg.mxu0
    %v675 = vadd.f32 %v575, %v673
    %v676 = vxor.u32 %v675, 2147483648
    %v677 = vmul.f32 %v676, 1.442695
    %v678 = vpow.pop %v677
    %v679 = vadd.f32 %v678, 1.0
    %v680 = vrcp.pop %v679
    %v681 = vmul.f32 %v679, %v680
    %v682 = vsub.f32 1.0, %v681
    %v683 = vmul.f32 %v680, %v682
    %v684 = vadd.f32 %v680, %v683
    %vm685 = vweird.f32 %v679
    %vm686 = vweird.f32 %v680
    %vm687 = vmor %vm685, %vm686
    %v688 = vsel %vm687, %v680, %v684
    %v689 = vand.u32 2147483647, %v679
    %vm690 = vcmp.eq.f32.partialorder %v689, 8.507059e+37
    %v691 = vand.u32 %v679, 2147483648
    %v692 = vor.u32 1.1754944e-38, %v691
    %v693 = vsel %vm690, %v692, %v688
    %v694 = vmul.f32 1.0, %v693
    %v695 = vadd.f32 %v673, %v622
    %697 = vrot.lane.b32.xlu0 %v695, 64
    %v698 = vpop.permute.xlu0 %697
    %v700 = vmul.f32 %v694, %v698
    %702 = vrot.lane.b32.xlu0 %v700, 64
    %v703 = vpop.permute.xlu0 %702
    %v705 = vadd.f32 %v575, %v703
    %v706 = vtanh.pop %v705
    %v707 = vsub.f32 %v649, %v706
    %709 = vrot.lane.b32.xlu0 %v707, 96
    %v710 = vpop.permute.xlu0 %709
    %v712 = vmul.f32 %v694, %v710
    %714 = vrot.lane.b32.xlu0 %v712, 32
    %v715 = vpop.permute.xlu0 %714
    %v717 = vadd.f32 %v706, %v715
    %v718 = vld [vmem:[%s6] sm:$0xff]
    %v719 = vld [vmem:[%s6 + $0x8] sm:$0xff]
    %v720 = vld [vmem:[%s6 + $0x10] sm:$0xff]
    %v721 = vld [vmem:[%s6 + $0x18] sm:$0xff]
    %v722 = vld [vmem:[%s6 + $0x20] sm:$0xff]
    %v723 = vld [vmem:[%s6 + $0x28] sm:$0xff]
    %v724 = vld [vmem:[%s6 + $0x30] sm:$0xff]
    %v725 = vld [vmem:[%s6 + $0x38] sm:$0xff]
    %v726 = vld [vmem:[%s6 + $0x40] sm:$0xff]
    %v727 = vld [vmem:[%s6 + $0x48] sm:$0xff]
    %v728 = vld [vmem:[%s6 + $0x50] sm:$0xff]
    %v729 = vld [vmem:[%s6 + $0x58] sm:$0xff]
    %v730 = vld [vmem:[%s6 + $0x60] sm:$0xff]
    %v731 = vld [vmem:[%s6 + $0x68] sm:$0xff]
    %v732 = vld [vmem:[%s6 + $0x70] sm:$0xff]
    %v733 = vld [vmem:[%s6 + $0x78] sm:$0xff]
    %v734 = vld [vmem:[%s6 + $0x80] sm:$0xff]
    %v735 = vld [vmem:[%s6 + $0x88] sm:$0xff]
    %v736 = vld [vmem:[%s6 + $0x90] sm:$0xff]
    %v737 = vld [vmem:[%s6 + $0x98] sm:$0xff]
    %v738 = vld [vmem:[%s6 + $0xa0] sm:$0xff]
    %v739 = vld [vmem:[%s6 + $0xa8] sm:$0xff]
    %v740 = vld [vmem:[%s6 + $0xb0] sm:$0xff]
    %v741 = vld [vmem:[%s6 + $0xb8] sm:$0xff]
    %v742 = vld [vmem:[%s6 + $0xc0] sm:$0xff]
    %v743 = vld [vmem:[%s6 + $0xc8] sm:$0xff]
    %v744 = vld [vmem:[%s6 + $0xd0] sm:$0xff]
    %v745 = vld [vmem:[%s6 + $0xd8] sm:$0xff]
    %v746 = vld [vmem:[%s6 + $0xe0] sm:$0xff]
    %v747 = vld [vmem:[%s6 + $0xe8] sm:$0xff]
    %v748 = vld [vmem:[%s6 + $0xf0] sm:$0xff]
    %v749 = vld [vmem:[%s6 + $0xf8] sm:$0xff]
    %v750 = vld [vmem:[%s6 + $0x100] sm:$0xff]
    %v751 = vld [vmem:[%s6 + $0x108] sm:$0xff]
    %v752 = vld [vmem:[%s6 + $0x110] sm:$0xff]
    %v753 = vld [vmem:[%s6 + $0x118] sm:$0xff]
    %v754 = vld [vmem:[%s6 + $0x120] sm:$0xff]
    %v755 = vld [vmem:[%s6 + $0x128] sm:$0xff]
    %v756 = vld [vmem:[%s6 + $0x130] sm:$0xff]
    %v757 = vld [vmem:[%s6 + $0x138] sm:$0xff]
    %v758 = vld [vmem:[%s6 + $0x140] sm:$0x1]
    %v759 = vld [vmem:[%s6 + $0x141] sm:$0x1]
    %v760 = vld [vmem:[%s6 + $0x142] sm:$0x1]
    %762 = vrot.lane.b32.xlu0 %v717, 64
    %v763 = vpop.permute.xlu0 %762
    %v764 = vsel %vm368, %v763, 0
    %766 = vmatpush.msra.mxu0 0.0
    %767 = vmatpush.msra.mxu0 0.0
    %768 = vmatpush.msra.mxu0 0.0
    %769 = vmatpush.msra.mxu0 0.0
    %770 = vmatpush.msra.mxu0 0.0
    %771 = vmatpush.msra.mxu0 0.0
    %772 = vmatpush.msra.mxu0 0.0
    %773 = vmatpush.msra.mxu0 0.0
    %774 = vmatpush.msra.mxu0 0.0
    %775 = vmatpush.msra.mxu0 0.0
    %776 = vmatpush.msra.mxu0 0.0
    %777 = vmatpush.msra.mxu0 0.0
    %778 = vmatpush.msra.mxu0 %v69
    %779 = vmatpush.msra.mxu0 %v67
    %780 = vmatpush.msra.mxu0 %v65
    %781 = vmatpush.msra.mxu0 %v63
    %782 = vmatmul.f32.gmra.mxu0 %v653
    %v783 = vpop.f32.mrf.mxu0
    %v784 = vadd.f32 0.0, %v783
    %785 = vmatmul.f32.gmra.mxu0 %v764
    %v786 = vpop.f32.mrf.mxu0
    %v787 = vadd.f32 0.0, %v786
    %788 = vdwg.mxu0
    %789 = vmatpush.msra.mxu0 0.0
    %790 = vmatpush.msra.mxu0 0.0
    %791 = vmatpush.msra.mxu0 0.0
    %792 = vmatpush.msra.mxu0 0.0
    %793 = vmatpush.msra.mxu0 0.0
    %794 = vmatpush.msra.mxu0 0.0
    %795 = vmatpush.msra.mxu0 0.0
    %796 = vmatpush.msra.mxu0 0.0
    %797 = vmatpush.msra.mxu0 0.0
    %798 = vmatpush.msra.mxu0 0.0
    %799 = vmatpush.msra.mxu0 0.0
    %800 = vmatpush.msra.mxu0 0.0
    %801 = vmatpush.msra.mxu0 %v70
    %802 = vmatpush.msra.mxu0 %v68
    %803 = vmatpush.msra.mxu0 %v66
    %804 = vmatpush.msra.mxu0 %v64
    %805 = vmatmul.f32.gmra.mxu0 %v653
    %v806 = vpop.f32.mrf.mxu0
    %v807 = vadd.f32 0.0, %v806
    %808 = vmatmul.f32.gmra.mxu0 %v764
    %v809 = vpop.f32.mrf.mxu0
    %v810 = vadd.f32 0.0, %v809
    %811 = vdwg.mxu0
    %v812 = vmul.f32 %v784, %v71
    %v813 = vmul.f32 %v807, %v72
    %v814 = vmul.f32 %v787, %v73
    %v815 = vmul.f32 %v810, %v74
    %v817 = vsel %vm171, %v75, 0
    %819 = vmatpush.msra.mxu0 0.0
    %820 = vmatpush.msra.mxu0 0.0
    %821 = vmatpush.msra.mxu0 0.0
    %822 = vmatpush.msra.mxu0 0.0
    %823 = vmatpush.msra.mxu0 0.0
    %824 = vmatpush.msra.mxu0 0.0
    %825 = vmatpush.msra.mxu0 0.0
    %826 = vmatpush.msra.mxu0 0.0
    %827 = vmatpush.msra.mxu0 0.0
    %828 = vmatpush.msra.mxu0 0.0
    %829 = vmatpush.msra.mxu0 0.0
    %830 = vmatpush.msra.mxu0 0.0
    %831 = vmatpush.msra.mxu0 0.0
    %832 = vmatpush.msra.mxu0 0.0
    %833 = vmatpush.msra.mxu0 %v814
    %834 = vmatpush.msra.mxu0 %v812
    %835 = vmatmul.f32.gmra.mxu0 %v817
    %v836 = vpop.f32.mrf.mxu0
    %v837 = vadd.f32 0.0, %v836
    %838 = vdwg.mxu0
    %839 = vmatpush.msra.mxu0 0.0
    %840 = vmatpush.msra.mxu0 0.0
    %841 = vmatpush.msra.mxu0 0.0
    %842 = vmatpush.msra.mxu0 0.0
    %843 = vmatpush.msra.mxu0 0.0
    %844 = vmatpush.msra.mxu0 0.0
    %845 = vmatpush.msra.mxu0 0.0
    %846 = vmatpush.msra.mxu0 0.0
    %847 = vmatpush.msra.mxu0 0.0
    %848 = vmatpush.msra.mxu0 0.0
    %849 = vmatpush.msra.mxu0 0.0
    %850 = vmatpush.msra.mxu0 0.0
    %851 = vmatpush.msra.mxu0 0.0
    %852 = vmatpush.msra.mxu0 0.0
    %853 = vmatpush.msra.mxu0 %v815
    %854 = vmatpush.msra.mxu0 %v813
    %855 = vmatmul.f32.gmra.mxu0 %v817
    %v856 = vpop.f32.mrf.mxu0
    %v857 = vadd.f32 0.0, %v856
    %858 = vdwg.mxu0
    %v859 = vperm.slane %v758, 0
    %860 = vmatpush.msra.mxu0 %v733
    %861 = vmatpush.msra.mxu0 %v732
    %862 = vmatpush.msra.mxu0 %v731
    %863 = vmatpush.msra.mxu0 %v730
    %864 = vmatpush.msra.mxu0 %v729
    %865 = vmatpush.msra.mxu0 %v728
    %866 = vmatpush.msra.mxu0 %v727
    %867 = vmatpush.msra.mxu0 %v726
    %868 = vmatpush.msra.mxu0 %v725
    %869 = vmatpush.msra.mxu0 %v724
    %870 = vmatpush.msra.mxu0 %v723
    %871 = vmatpush.msra.mxu0 %v722
    %872 = vmatpush.msra.mxu0 %v721
    %873 = vmatpush.msra.mxu0 %v720
    %874 = vmatpush.msra.mxu0 %v719
    %875 = vmatpush.msra.mxu0 %v718
    %876 = vmatmul.f32.gmra.mxu0 %v837
    %v877 = vpop.f32.mrf.mxu0
    %v878 = vadd.f32 %v859, %v877
    %879 = vdwg.mxu0
    %880 = vmatpush.msra.mxu0 %v749
    %881 = vmatpush.msra.mxu0 %v748
    %882 = vmatpush.msra.mxu0 %v747
    %883 = vmatpush.msra.mxu0 %v746
    %884 = vmatpush.msra.mxu0 %v745
    %885 = vmatpush.msra.mxu0 %v744
    %886 = vmatpush.msra.mxu0 %v743
    %887 = vmatpush.msra.mxu0 %v742
    %888 = vmatpush.msra.mxu0 %v741
    %889 = vmatpush.msra.mxu0 %v740
    %890 = vmatpush.msra.mxu0 %v739
    %891 = vmatpush.msra.mxu0 %v738
    %892 = vmatpush.msra.mxu0 %v737
    %893 = vmatpush.msra.mxu0 %v736
    %894 = vmatpush.msra.mxu0 %v735
    %895 = vmatpush.msra.mxu0 %v734
    %896 = vmatmul.f32.gmra.mxu0 %v857
    %v897 = vpop.f32.mrf.mxu0
    %v898 = vadd.f32 %v878, %v897
    %899 = vdwg.mxu0
    %v900 = vmax.f32 %v898, 0.0
    %v901 = vperm.slane %v759, 0
    %903 = vrot.lane.b32.xlu0 %v900, 120
    %v904 = vpop.permute.xlu0 %903
    %v905 = vsel %vm141, %v904, 0
    %907 = vmatpush.msra.mxu0 0.0
    %908 = vmatpush.msra.mxu0 0.0
    %909 = vmatpush.msra.mxu0 0.0
    %910 = vmatpush.msra.mxu0 0.0
    %911 = vmatpush.msra.mxu0 0.0
    %912 = vmatpush.msra.mxu0 0.0
    %913 = vmatpush.msra.mxu0 0.0
    %914 = vmatpush.msra.mxu0 0.0
    %915 = vmatpush.msra.mxu0 %v757
    %916 = vmatpush.msra.mxu0 %v756
    %917 = vmatpush.msra.mxu0 %v755
    %918 = vmatpush.msra.mxu0 %v754
    %919 = vmatpush.msra.mxu0 %v753
    %920 = vmatpush.msra.mxu0 %v752
    %921 = vmatpush.msra.mxu0 %v751
    %922 = vmatpush.msra.mxu0 %v750
    %923 = vmatmul.f32.gmra.mxu0 %v905
    %v924 = vpop.f32.mrf.mxu0
    %v925 = vadd.f32 %v901, %v924
    %926 = vdwg.mxu0
    %v927 = vmax.f32 %v925, 0.0
    %v928 = vperm.slane %v760, 0
    %937 = vrot.lane.b32.xlu0 %v750, 64
    %v938 = vpop.permute.xlu0 %937
    %939 = vrot.lane.b32.xlu0 %v751, 64
    %v940 = vpop.permute.xlu0 %939
    %941 = vrot.lane.b32.xlu0 %v752, 64
    %v942 = vpop.permute.xlu0 %941
    %943 = vrot.lane.b32.xlu0 %v753, 64
    %v944 = vpop.permute.xlu0 %943
    %945 = vrot.lane.b32.xlu0 %v754, 64
    %v946 = vpop.permute.xlu0 %945
    %947 = vrot.lane.b32.xlu0 %v755, 64
    %v948 = vpop.permute.xlu0 %947
    %949 = vrot.lane.b32.xlu0 %v756, 64
    %v950 = vpop.permute.xlu0 %949
    %951 = vrot.lane.b32.xlu0 %v757, 64
    %v952 = vpop.permute.xlu0 %951
    %v962 = vsel %vm141, %v927, 0
    %964 = vmatpush.msra.mxu0 0.0
    %965 = vmatpush.msra.mxu0 0.0
    %966 = vmatpush.msra.mxu0 0.0
    %967 = vmatpush.msra.mxu0 0.0
    %968 = vmatpush.msra.mxu0 0.0
    %969 = vmatpush.msra.mxu0 0.0
    %970 = vmatpush.msra.mxu0 0.0
    %971 = vmatpush.msra.mxu0 0.0
    %972 = vmatpush.msra.mxu0 %v952
    %973 = vmatpush.msra.mxu0 %v950
    %974 = vmatpush.msra.mxu0 %v948
    %975 = vmatpush.msra.mxu0 %v946
    %976 = vmatpush.msra.mxu0 %v944
    %977 = vmatpush.msra.mxu0 %v942
    %978 = vmatpush.msra.mxu0 %v940
    %979 = vmatpush.msra.mxu0 %v938
    %980 = vmatmul.f32.gmra.mxu0 %v962
    %v981 = vpop.f32.mrf.mxu0
    %v982 = vadd.f32 %v928, %v981
    %983 = vdwg.mxu0
    %vm984 = vcmask 64512
    %v985 = vsel %vm984, %v900, 0
    %987 = vmatpush.msra.mxu0 0.0
    %988 = vmatpush.msra.mxu0 0.0
    %989 = vmatpush.msra.mxu0 0.0
    %990 = vmatpush.msra.mxu0 0.0
    %991 = vmatpush.msra.mxu0 0.0
    %992 = vmatpush.msra.mxu0 0.0
    %993 = vmatpush.msra.mxu0 0.0
    %994 = vmatpush.msra.mxu0 0.0
    %995 = vmatpush.msra.mxu0 0.0
    %996 = vmatpush.msra.mxu0 0.0
    %997 = vmatpush.msra.mxu0 0.0
    %998 = vmatpush.msra.mxu0 0.0
    %999 = vmatpush.msra.mxu0 0.0
    %1000 = vmatpush.msra.mxu0 0.0
    %1001 = vmatpush.msra.mxu0 0.0
    %1002 = vmatpush.msra.mxu0 %v76
    %1003 = vmatmul.f32.gmra.mxu0 %v985
    %v1004 = vpop.f32.mrf.mxu0
    %v1005 = vadd.f32 0.0, %v1004
    %1006 = vdwg.mxu0
    %1008 = vset.pattern.permute.xlu0 0
    %1009 = vperm.xlu0 %1008, %v982
    %v1010 = vpop.permute.xlu0 %1009
    %v1012 = vadd.f32 %v1010, %v1005
    %vm1013 = vcmask 58368
    %1014 = vst.msk [vmem:[#allocation5] sm:$0x3] %vm1013, %v1012
    // Predicated region
    $region38: #{tpu_custom_call.1} parent=1 // pred_check
      _
    $region39: #{tpu_custom_call.1} parent=1 // pred_check_branch
      %1016 = sbr.rel (0) target = $region41
    $region40: #{tpu_custom_call.1} parent=1 // pred_region
      %1018 = vsyncadd [#allocation4], 0
      %s1020 = sshll.u32 [#allocation5], 4
      %s1021 = int_to_ptr.vmem [resolvable:$true] %s1020
      %s1022 = sshll.u32 %s8, 4
      %s1023 = int_to_ptr.hbm [resolvable:$true] %s1022
      %1025 = dma.vmem_to_hbm [thread:$0]  %s1021, 32, %s1023, [#allocation4]
    $region41: #{tpu_custom_call.1} parent=1 // pred_fallthru
      _
    // Predicated region
    $region42: #{tpu_custom_call.1} parent=1 // pred_check
      _
    $region43: #{tpu_custom_call.1} parent=1 // pred_check_branch
      %1027 = sbr.rel (0) target = $region45
    $region44: #{tpu_custom_call.1} parent=1 // pred_region
      %1029 = dma.done [#allocation4], 32
    $region45: #{tpu_custom_call.1} parent=1 // pred_fallthru
      _
    %1030 = vsyncpa [#allocation3], 1
    %1031 = vsyncpa [#allocation4], 1

</llo_original>
